<compile_context>
chip_gen: v6e
topology: v6e:2x2x1
jax: 0.10.0
libtpu: 0.0.40
codegen_flags: <defaults>
</compile_context>

<pallas_src>
import functools

import jax
import jax.numpy as jnp
from jax import lax
from jax.experimental import pallas as pl
from jax.experimental.pallas import tpu as pltpu

_INV_SQRT2 = 0.7071067811865476
_SQRT_2_OVER_PI = 0.7978845608028654


def _ldp_kernel(x_ref, pw1w_ref, pw1b_ref, dw1w_ref, dw1b_ref,
                dw2w_ref, dw2b_ref, pw3w_ref, pw3b_ref,
                o_ref, pad_ref, *, approx_gelu):
    Bblk, Hp, Wp, C = pad_ref.shape
    H, W = Hp - 2, Wp - 2
    Ho, Wo = (H + 1) // 2, (W + 1) // 2
    M = Bblk * H * W

    pw1w = pw1w_ref[...]                      # (C, C) bf16, pre-transposed
    pw1b = pw1b_ref[...]                      # (1, C) f32

    def pointwise(v_bf16, wmat, brow):
        # bf16 MXU inputs, f32 accumulation; bias added in f32.
        return jnp.dot(v_bf16, wmat, preferred_element_type=jnp.float32) + brow

    def gelu(v):
        if approx_gelu:
            # tanh form -> EUP slot (cheaper than the erf polynomial on VALU).
            return 0.5 * v * (1.0 + jnp.tanh(
                _SQRT_2_OVER_PI * (v + 0.044715 * v * v * v)))
        return 0.5 * v * (1.0 + lax.erf(v * _INV_SQRT2))   # torch nn.GELU()

    # Zero ONLY the 1-wide border of the padded scratch; the interior is fully
    # overwritten before each depthwise use.  Done every grid step on purpose:
    # a program_id==0 guard would be wrong under megacore 'parallel' sharding
    # (the second core would never initialize its private scratch).
    zrow = jnp.zeros((Bblk, 1, Wp, C), jnp.float32)
    zcol = jnp.zeros((Bblk, Hp, 1, C), jnp.float32)
    pad_ref[:, 0:1, :, :] = zrow
    pad_ref[:, Hp - 1:Hp, :, :] = zrow
    pad_ref[:, :, 0:1, :] = zcol
    pad_ref[:, :, Wp - 1:Wp, :] = zcol

    # pointwise1 -> gelu -> pointwise1 (re-used, as in the torch forward).
    x = pointwise(x_ref[...], pw1w, pw1b)     # x_ref already bf16, (M, C) f32 out
    x = gelu(x)
    x = pointwise(x.astype(jnp.bfloat16), pw1w, pw1b)

    # Pre-depthwise1 activations go into the pad interior: this is both the
    # depthwise1 input and the later residual source, so no `skip` value stays
    # live across the depthwise loop / following matmul.
    pad_ref[:, 1:H + 1, 1:W + 1, :] = x.reshape(Bblk, H, W, C)

    # depthwise1: 3x3, stride 1, pad 1 -> 9 shifted VPU MACs.
    # TODO(synk): load one kh row-slab and derive the kw taps with pltpu.roll
    # (XLU slot) once the lowering is verified in a bundle dump -> 3x fewer
    # VMEM reads and no sublane-misaligned loads.
    w1 = dw1w_ref[...]                        # (9, C), k = kh*3 + kw
    acc = jnp.zeros((Bblk, H, W, C), jnp.float32)
    for kh in range(3):
        for kw in range(3):
            acc = acc + pad_ref[:, kh:kh + H, kw:kw + W, :] * w1[kh * 3 + kw]
    x = acc + dw1b_ref[...]

    # pointwise1 (re-used), then the residual add read back from the pad
    # interior (still holds pre-depthwise1 x) instead of a live register copy.
    x = pointwise(x.reshape(M, C).astype(jnp.bfloat16), pw1w, pw1b)
    x = x.reshape(Bblk, H, W, C) + pad_ref[:, 1:H + 1, 1:W + 1, :]

    # depthwise2: 3x3, stride 2, pad 1 -> computed directly at stride 2 by
    # accumulating 9 strided slices of the padded scratch.
    pad_ref[:, 1:H + 1, 1:W + 1, :] = x
    w2 = dw2w_ref[...]                        # (9, C)
    acc2 = jnp.zeros((Bblk, Ho, Wo, C), jnp.float32)
    for kh in range(3):
        for kw in range(3):
            tap = pad_ref[:, pl.ds(kh, Ho, stride=2), pl.ds(kw, Wo, stride=2), :]
            acc2 = acc2 + tap * w2[kh * 3 + kw]
    y = acc2 + dw2b_ref[...]                  # (Bblk, Ho, Wo, C)

    # pointwise3, then a single lane-dense full-block store.
    y = pointwise(y.reshape(Bblk * Ho * Wo, C).astype(jnp.bfloat16),
                  pw3w_ref[...], pw3b_ref[...])
    o_ref[...] = y.astype(o_ref.dtype)


def ldp_forward_nhwc(x_nhwc, params, *, batch_block=None, approx_gelu=False,
                     out_dtype=None):
    """LDP forward on an NHWC activation. Returns (B, Ho, Wo, C) NHWC."""
    B, H, W, C = x_nhwc.shape
    assert params["pw1_w"].shape == (C, C), \
        "forward re-uses pointwise1 -> in_channels must equal out_channels"
    Ho, Wo = (H + 1) // 2, (W + 1) // 2
    out_dtype = x_nhwc.dtype if out_dtype is None else out_dtype

    # Flatten whole images into the matmul M dimension: pick the smallest batch
    # block whose pointwise M = Bblk*H*W reaches the MXU sweet spot (>=256
    # rows), while keeping the per-step f32 working set modest.
    if batch_block is None:
        batch_block = 1
        for d in range(1, B + 1):
            if B % d:
                continue
            if d > 1 and d * H * W * C * 4 > (4 << 20):
                break
            batch_block = d
            if d * H * W >= 256:
                break
    assert B % batch_block == 0
    Mb = batch_block * H * W
    Mo = batch_block * Ho * Wo
    assert batch_block == B or (Mb % 8 == 0 and Mo % 8 == 0), \
        "row blocks must be sublane aligned"

    # bf16 input halves HBM->VMEM DMA and the double-buffered input block;
    # pointwise1 consumes bf16 on the MXU anyway.  2D (rows, C) layout lets the
    # first matmul use x_ref directly and keeps the output store lane-dense.
    x2d = x_nhwc.reshape(B * H * W, C).astype(jnp.bfloat16)

    pw1_wt = params["pw1_w"].T.astype(jnp.bfloat16)            # (Cin, Cout)
    pw3_wt = params["pw3_w"].T.astype(jnp.bfloat16)
    pw1_b = params["pw1_b"].reshape(1, C).astype(jnp.float32)
    pw3_b = params["pw3_b"].reshape(1, C).astype(jnp.float32)
    dw1_w = params["dw1_w"].reshape(C, 9).T.astype(jnp.float32)  # (9,C), k=kh*3+kw
    dw2_w = params["dw2_w"].reshape(C, 9).T.astype(jnp.float32)
    dw1_b = params["dw1_b"].reshape(1, C).astype(jnp.float32)
    dw2_b = params["dw2_b"].reshape(1, C).astype(jnp.float32)

    def const_spec(shape):
        # TODO(synk): pipeline_mode=pl.Buffered(1) would single-buffer these
        # constant-index blocks and free a little VMEM headroom on v7x.
        return pl.BlockSpec(shape, lambda i: (0,) * len(shape))

    # Explicit VMEM budget: double-buffered I/O blocks + pad scratch + weight
    # blocks + live f32 intermediates, clamped to fit v7x's 64 MiB VMEM.
    est = (2 * Mb * C * 2
           + 2 * Mo * C * jnp.dtype(out_dtype).itemsize
           + batch_block * (H + 2) * (W + 2) * C * 4
           + 2 * (2 * C * C * 2 + 2 * 9 * C * 4 + 4 * C * 4)
           + 8 * Mb * C * 4)
    vmem_limit = int(min(max(est, 32 << 20), 64 << 20))

    out2d = pl.pallas_call(
        functools.partial(_ldp_kernel, approx_gelu=approx_gelu),
        out_shape=jax.ShapeDtypeStruct((B * Ho * Wo, C), out_dtype),
        grid_spec=pltpu.PrefetchScalarGridSpec(
            num_scalar_prefetch=0,
            grid=(B // batch_block,),
            in_specs=[
                pl.BlockSpec((Mb, C), lambda i: (i, 0)),  # activations (bf16)
                const_spec((C, C)),    # pointwise1 weight (pre-transposed, bf16)
                const_spec((1, C)),    # pointwise1 bias
                const_spec((9, C)),    # depthwise1 weight
                const_spec((1, C)),    # depthwise1 bias
                const_spec((9, C)),    # depthwise2 weight
                const_spec((1, C)),    # depthwise2 bias
                const_spec((C, C)),    # pointwise3 weight (pre-transposed, bf16)
                const_spec((1, C)),    # pointwise3 bias
            ],
            out_specs=pl.BlockSpec((Mo, C), lambda i: (i, 0)),
            scratch_shapes=[
                pltpu.VMEM((batch_block, H + 2, W + 2, C), jnp.float32),
            ],
        ),
        compiler_params=pltpu.CompilerParams(
            dimension_semantics=("parallel",),
            vmem_limit_bytes=vmem_limit),
    )(x2d, pw1_wt, pw1_b, dw1_w, dw1_b, dw2_w, dw2_b, pw3_wt, pw3_b)

    # TODO(synk): when B is small (inference), add a second 'parallel' grid
    # axis over row bands (1-row halo) so both v7x TensorCores stay busy.
    return out2d.reshape(B, Ho, Wo, C)


def ldp_forward(x_nchw, params, **kwargs):
    """NCHW wrapper matching the torch module's layout."""
    # TODO(synk): keep the surrounding model NHWC end-to-end; these two
    # full-tensor HBM transposes can cost as much as the kernel at small H, W.
    x_nhwc = jnp.transpose(x_nchw, (0, 2, 3, 1))
    out_nhwc = ldp_forward_nhwc(x_nhwc, params, **kwargs)
    return jnp.transpose(out_nhwc, (0, 3, 1, 2))


def ldp_reference(x_nchw, params):
    """Pure-JAX (XLA, f32) reference with identical semantics, NCHW like torch."""
    dn = ("NCHW", "OIHW", "NCHW")
    prec = lax.Precision.HIGHEST

    def pw(x, w, b):
        y = lax.conv_general_dilated(x, w[:, :, None, None], (1, 1), "VALID",
                                     dimension_numbers=dn, precision=prec)
        return y + b[None, :, None, None]

    def dw(x, w, b, stride):
        y = lax.conv_general_dilated(x, w[:, None, :, :], (stride, stride),
                                     ((1, 1), (1, 1)), dimension_numbers=dn,
                                     feature_group_count=x.shape[1],
                                     precision=prec)
        return y + b[None, :, None, None]

    def gelu(v):
        return 0.5 * v * (1.0 + lax.erf(v * _INV_SQRT2))

    x = pw(x_nchw, params["pw1_w"], params["pw1_b"])
    x = gelu(x)
    x = pw(x, params["pw1_w"], params["pw1_b"])
    skip = x
    x = dw(x, params["dw1_w"], params["dw1_b"], 1)
    x = pw(x, params["pw1_w"], params["pw1_b"])
    x = x + skip
    x = dw(x, params["dw2_w"], params["dw2_b"], 2)
    # torch bilinear-resizes `identity` here, but never uses it -> no-op.
    x = pw(x, params["pw3_w"], params["pw3_b"])
    return x


def init_params(key, c):
    ks = jax.random.split(key, 8)
    s = 1.0 / float(c) ** 0.5
    return {
        "pw1_w": jax.random.normal(ks[0], (c, c), jnp.float32) * s,
        "pw1_b": jax.random.normal(ks[1], (c,), jnp.float32) * 0.05,
        "dw1_w": jax.random.normal(ks[2], (c, 3, 3), jnp.float32) * (1.0 / 3.0),
        "dw1_b": jax.random.normal(ks[3], (c,), jnp.float32) * 0.05,
        "dw2_w": jax.random.normal(ks[4], (c, 3, 3), jnp.float32) * (1.0 / 3.0),
        "dw2_b": jax.random.normal(ks[5], (c,), jnp.float32) * 0.05,
        "pw3_w": jax.random.normal(ks[6], (c, c), jnp.float32) * s,
        "pw3_b": jax.random.normal(ks[7], (c,), jnp.float32) * 0.05,
        # pointwise2 / LayerNorm exist in __init__ but are unused in forward.
    }


if __name__ == "__main__":
    key = jax.random.PRNGKey(0)
    kx, kp = jax.random.split(key)
    B, C, H, W = 2, 128, 8, 8                       # small, NCHW like torch
    x = jax.random.normal(kx, (B, C, H, W), jnp.float32)
    params = init_params(kp, C)

    out = jax.block_until_ready(ldp_forward(x, params))
    ref = jax.block_until_ready(ldp_reference(x, params))

    assert out.shape == (B, C, (H + 1) // 2, (W + 1) // 2), out.shape
    # Tolerance accounts for bf16 MXU inputs on the four pointwise matmuls
    # (f32 accumulation); reference is full f32.
    assert bool(jnp.allclose(out, ref, rtol=5e-2, atol=5e-2)), \
        float(jnp.max(jnp.abs(out - ref)))
    print("KERNEL_OK")
</pallas_src>

<mosaic_0001>
module attributes {stable_mosaic.version = 11 : i64} {
  func.func @_ldp_kernel(%arg0: i32, %arg1: memref<128x128xbf16, #tpu.memory_space<vmem>>, %arg2: memref<128x128xbf16, #tpu.memory_space<vmem>>, %arg3: memref<1x128xf32, #tpu.memory_space<vmem>>, %arg4: memref<9x128xf32, #tpu.memory_space<vmem>>, %arg5: memref<1x128xf32, #tpu.memory_space<vmem>>, %arg6: memref<9x128xf32, #tpu.memory_space<vmem>>, %arg7: memref<1x128xf32, #tpu.memory_space<vmem>>, %arg8: memref<128x128xbf16, #tpu.memory_space<vmem>>, %arg9: memref<1x128xf32, #tpu.memory_space<vmem>>, %arg10: memref<32x128xf32, #tpu.memory_space<vmem>>, %arg11: memref<2x10x10x128xf32, #tpu.memory_space<vmem>>) attributes {dimension_semantics = [#tpu.dimension_semantics<parallel>], iteration_bounds = array<i64: 1>, scalar_prefetch = 0 : i64, scratch_operands = 1 : i64, tpu.core_type = #tpu.core_type<tc>, window_params = [{transform_indices = @transform_0, window_bounds = array<i64: 128, 128>}, {pipeline_mode = #tpu.pipeline_mode<synchronous>, transform_indices = @transform_1, window_bounds = array<i64: 128, 128>}, {pipeline_mode = #tpu.pipeline_mode<synchronous>, transform_indices = @transform_2, window_bounds = array<i64: 1, 128>}, {pipeline_mode = #tpu.pipeline_mode<synchronous>, transform_indices = @transform_3, window_bounds = array<i64: 9, 128>}, {pipeline_mode = #tpu.pipeline_mode<synchronous>, transform_indices = @transform_4, window_bounds = array<i64: 1, 128>}, {pipeline_mode = #tpu.pipeline_mode<synchronous>, transform_indices = @transform_5, window_bounds = array<i64: 9, 128>}, {pipeline_mode = #tpu.pipeline_mode<synchronous>, transform_indices = @transform_6, window_bounds = array<i64: 1, 128>}, {pipeline_mode = #tpu.pipeline_mode<synchronous>, transform_indices = @transform_7, window_bounds = array<i64: 128, 128>}, {pipeline_mode = #tpu.pipeline_mode<synchronous>, transform_indices = @transform_8, window_bounds = array<i64: 1, 128>}, {transform_indices = @transform_9, window_bounds = array<i64: 32, 128>}]} {
    %c0 = arith.constant 0 : index
    %c0_0 = arith.constant 0 : index
    %0 = vector.load %arg2[%c0, %c0_0] : memref<128x128xbf16, #tpu.memory_space<vmem>>, vector<128x128xbf16>
    %c0_1 = arith.constant 0 : index
    %c0_2 = arith.constant 0 : index
    %1 = vector.load %arg3[%c0_1, %c0_2] : memref<1x128xf32, #tpu.memory_space<vmem>>, vector<1x128xf32>
    %cst = arith.constant 0.000000e+00 : f32
    %2 = vector.broadcast %cst : f32 to vector<2x1x10x128xf32>
    %cst_3 = arith.constant 0.000000e+00 : f32
    %3 = vector.broadcast %cst_3 : f32 to vector<2x10x1x128xf32>
    %c0_4 = arith.constant 0 : index
    %c0_5 = arith.constant 0 : index
    %c0_6 = arith.constant 0 : index
    %c0_7 = arith.constant 0 : index
    %4 = vector.load %arg11[%c0_4, %c0_5, %c0_6, %c0_7] : memref<2x10x10x128xf32, #tpu.memory_space<vmem>>, vector<2x1x10x128xf32>
    tpu.vector_store %arg11[%c0_4, %c0_5, %c0_6, %c0_7], %2 {strides = array<i32>} : memref<2x10x10x128xf32, #tpu.memory_space<vmem>>, vector<2x1x10x128xf32>,
    %c0_8 = arith.constant 0 : index
    %c9 = arith.constant 9 : index
    %c0_9 = arith.constant 0 : index
    %c0_10 = arith.constant 0 : index
    %5 = vector.load %arg11[%c0_8, %c9, %c0_9, %c0_10] : memref<2x10x10x128xf32, #tpu.memory_space<vmem>>, vector<2x1x10x128xf32>
    tpu.vector_store %arg11[%c0_8, %c9, %c0_9, %c0_10], %2 {strides = array<i32>} : memref<2x10x10x128xf32, #tpu.memory_space<vmem>>, vector<2x1x10x128xf32>,
    %c0_11 = arith.constant 0 : index
    %c0_12 = arith.constant 0 : index
    %c0_13 = arith.constant 0 : index
    %c0_14 = arith.constant 0 : index
    %6 = vector.load %arg11[%c0_11, %c0_12, %c0_13, %c0_14] : memref<2x10x10x128xf32, #tpu.memory_space<vmem>>, vector<2x10x1x128xf32>
    tpu.vector_store %arg11[%c0_11, %c0_12, %c0_13, %c0_14], %3 {strides = array<i32>} : memref<2x10x10x128xf32, #tpu.memory_space<vmem>>, vector<2x10x1x128xf32>,
    %c0_15 = arith.constant 0 : index
    %c0_16 = arith.constant 0 : index
    %c9_17 = arith.constant 9 : index
    %c0_18 = arith.constant 0 : index
    %7 = vector.load %arg11[%c0_15, %c0_16, %c9_17, %c0_18] : memref<2x10x10x128xf32, #tpu.memory_space<vmem>>, vector<2x10x1x128xf32>
    tpu.vector_store %arg11[%c0_15, %c0_16, %c9_17, %c0_18], %3 {strides = array<i32>} : memref<2x10x10x128xf32, #tpu.memory_space<vmem>>, vector<2x10x1x128xf32>,
    %c0_19 = arith.constant 0 : index
    %c0_20 = arith.constant 0 : index
    %8 = vector.load %arg1[%c0_19, %c0_20] : memref<128x128xbf16, #tpu.memory_space<vmem>>, vector<128x128xbf16>
    %cst_21 = arith.constant dense<0.000000e+00> : vector<128x128xf32>
    %9 = tpu.matmul %8, %0, %cst_21 {dimension_numbers = #tpu.dot_dimension_numbers<[1], [0], [0], [1], [0, 0, 1, 1], [], []>} : vector<128x128xbf16>, vector<128x128xbf16>, vector<128x128xf32> -> vector<128x128xf32>
    %10 = vector.broadcast %1 : vector<1x128xf32> to vector<128x128xf32>
    %11 = arith.addf %9, %10 : vector<128x128xf32>
    %cst_22 = arith.constant 5.000000e-01 : f32
    %12 = vector.broadcast %cst_22 : f32 to vector<128x128xf32>
    %13 = arith.mulf %12, %11 : vector<128x128xf32>
    %cst_23 = arith.constant 0.707106769 : f32
    %14 = vector.broadcast %cst_23 : f32 to vector<128x128xf32>
    %15 = arith.mulf %11, %14 : vector<128x128xf32>
    %16 = math.erf %15 : vector<128x128xf32>
    %cst_24 = arith.constant 1.000000e+00 : f32
    %17 = vector.broadcast %cst_24 : f32 to vector<128x128xf32>
    %18 = arith.addf %17, %16 : vector<128x128xf32>
    %19 = arith.mulf %13, %18 : vector<128x128xf32>
    %20 = arith.truncf %19 : vector<128x128xf32> to vector<128x128xbf16>
    %cst_25 = arith.constant dense<0.000000e+00> : vector<128x128xf32>
    %21 = tpu.matmul %20, %0, %cst_25 {dimension_numbers = #tpu.dot_dimension_numbers<[1], [0], [0], [1], [0, 0, 1, 1], [], []>} : vector<128x128xbf16>, vector<128x128xbf16>, vector<128x128xf32> -> vector<128x128xf32>
    %22 = vector.broadcast %1 : vector<1x128xf32> to vector<128x128xf32>
    %23 = arith.addf %21, %22 : vector<128x128xf32>
    %24 = vector.shape_cast %23 : vector<128x128xf32> to vector<2x8x8x128xf32>
    %c0_26 = arith.constant 0 : index
    %c1 = arith.constant 1 : index
    %c1_27 = arith.constant 1 : index
    %c0_28 = arith.constant 0 : index
    %25 = vector.load %arg11[%c0_26, %c1, %c1_27, %c0_28] : memref<2x10x10x128xf32, #tpu.memory_space<vmem>>, vector<2x8x8x128xf32>
    tpu.vector_store %arg11[%c0_26, %c1, %c1_27, %c0_28], %24 {strides = array<i32>} : memref<2x10x10x128xf32, #tpu.memory_space<vmem>>, vector<2x8x8x128xf32>,
    %c0_29 = arith.constant 0 : index
    %c0_30 = arith.constant 0 : index
    %26 = vector.load %arg4[%c0_29, %c0_30] : memref<9x128xf32, #tpu.memory_space<vmem>>, vector<9x128xf32>
    %cst_31 = arith.constant 0.000000e+00 : f32
    %27 = vector.broadcast %cst_31 : f32 to vector<2x8x8x128xf32>
    %c0_32 = arith.constant 0 : index
    %c0_33 = arith.constant 0 : index
    %c0_34 = arith.constant 0 : index
    %c0_35 = arith.constant 0 : index
    %28 = vector.load %arg11[%c0_32, %c0_33, %c0_34, %c0_35] : memref<2x10x10x128xf32, #tpu.memory_space<vmem>>, vector<2x8x8x128xf32>
    %29 = vector.extract_strided_slice %26 {offsets = [0, 0], sizes = [1, 128], strides = [1, 1]} : vector<9x128xf32> to vector<1x128xf32>
    %30 = vector.shape_cast %29 : vector<1x128xf32> to vector<128xf32>
    %31 = vector.shape_cast %30 : vector<128xf32> to vector<1x1x1x128xf32>
    %32 = vector.broadcast %31 : vector<1x1x1x128xf32> to vector<2x8x8x128xf32>
    %33 = arith.mulf %28, %32 : vector<2x8x8x128xf32>
    %34 = arith.addf %27, %33 : vector<2x8x8x128xf32>
    %c0_36 = arith.constant 0 : index
    %c0_37 = arith.constant 0 : index
    %c1_38 = arith.constant 1 : index
    %c0_39 = arith.constant 0 : index
    %35 = vector.load %arg11[%c0_36, %c0_37, %c1_38, %c0_39] : memref<2x10x10x128xf32, #tpu.memory_space<vmem>>, vector<2x8x8x128xf32>
    %36 = vector.extract_strided_slice %26 {offsets = [1, 0], sizes = [1, 128], strides = [1, 1]} : vector<9x128xf32> to vector<1x128xf32>
    %37 = vector.shape_cast %36 : vector<1x128xf32> to vector<128xf32>
    %38 = vector.shape_cast %37 : vector<128xf32> to vector<1x1x1x128xf32>
    %39 = vector.broadcast %38 : vector<1x1x1x128xf32> to vector<2x8x8x128xf32>
    %40 = arith.mulf %35, %39 : vector<2x8x8x128xf32>
    %41 = arith.addf %34, %40 : vector<2x8x8x128xf32>
    %c0_40 = arith.constant 0 : index
    %c0_41 = arith.constant 0 : index
    %c2 = arith.constant 2 : index
    %c0_42 = arith.constant 0 : index
    %42 = vector.load %arg11[%c0_40, %c0_41, %c2, %c0_42] : memref<2x10x10x128xf32, #tpu.memory_space<vmem>>, vector<2x8x8x128xf32>
    %43 = vector.extract_strided_slice %26 {offsets = [2, 0], sizes = [1, 128], strides = [1, 1]} : vector<9x128xf32> to vector<1x128xf32>
    %44 = vector.shape_cast %43 : vector<1x128xf32> to vector<128xf32>
    %45 = vector.shape_cast %44 : vector<128xf32> to vector<1x1x1x128xf32>
    %46 = vector.broadcast %45 : vector<1x1x1x128xf32> to vector<2x8x8x128xf32>
    %47 = arith.mulf %42, %46 : vector<2x8x8x128xf32>
    %48 = arith.addf %41, %47 : vector<2x8x8x128xf32>
    %c0_43 = arith.constant 0 : index
    %c1_44 = arith.constant 1 : index
    %c0_45 = arith.constant 0 : index
    %c0_46 = arith.constant 0 : index
    %49 = vector.load %arg11[%c0_43, %c1_44, %c0_45, %c0_46] : memref<2x10x10x128xf32, #tpu.memory_space<vmem>>, vector<2x8x8x128xf32>
    %50 = vector.extract_strided_slice %26 {offsets = [3, 0], sizes = [1, 128], strides = [1, 1]} : vector<9x128xf32> to vector<1x128xf32>
    %51 = vector.shape_cast %50 : vector<1x128xf32> to vector<128xf32>
    %52 = vector.shape_cast %51 : vector<128xf32> to vector<1x1x1x128xf32>
    %53 = vector.broadcast %52 : vector<1x1x1x128xf32> to vector<2x8x8x128xf32>
    %54 = arith.mulf %49, %53 : vector<2x8x8x128xf32>
    %55 = arith.addf %48, %54 : vector<2x8x8x128xf32>
    %c0_47 = arith.constant 0 : index
    %c1_48 = arith.constant 1 : index
    %c1_49 = arith.constant 1 : index
    %c0_50 = arith.constant 0 : index
    %56 = vector.load %arg11[%c0_47, %c1_48, %c1_49, %c0_50] : memref<2x10x10x128xf32, #tpu.memory_space<vmem>>, vector<2x8x8x128xf32>
    %57 = vector.extract_strided_slice %26 {offsets = [4, 0], sizes = [1, 128], strides = [1, 1]} : vector<9x128xf32> to vector<1x128xf32>
    %58 = vector.shape_cast %57 : vector<1x128xf32> to vector<128xf32>
    %59 = vector.shape_cast %58 : vector<128xf32> to vector<1x1x1x128xf32>
    %60 = vector.broadcast %59 : vector<1x1x1x128xf32> to vector<2x8x8x128xf32>
    %61 = arith.mulf %56, %60 : vector<2x8x8x128xf32>
    %62 = arith.addf %55, %61 : vector<2x8x8x128xf32>
    %c0_51 = arith.constant 0 : index
    %c1_52 = arith.constant 1 : index
    %c2_53 = arith.constant 2 : index
    %c0_54 = arith.constant 0 : index
    %63 = vector.load %arg11[%c0_51, %c1_52, %c2_53, %c0_54] : memref<2x10x10x128xf32, #tpu.memory_space<vmem>>, vector<2x8x8x128xf32>
    %64 = vector.extract_strided_slice %26 {offsets = [5, 0], sizes = [1, 128], strides = [1, 1]} : vector<9x128xf32> to vector<1x128xf32>
    %65 = vector.shape_cast %64 : vector<1x128xf32> to vector<128xf32>
    %66 = vector.shape_cast %65 : vector<128xf32> to vector<1x1x1x128xf32>
    %67 = vector.broadcast %66 : vector<1x1x1x128xf32> to vector<2x8x8x128xf32>
    %68 = arith.mulf %63, %67 : vector<2x8x8x128xf32>
    %69 = arith.addf %62, %68 : vector<2x8x8x128xf32>
    %c0_55 = arith.constant 0 : index
    %c2_56 = arith.constant 2 : index
    %c0_57 = arith.constant 0 : index
    %c0_58 = arith.constant 0 : index
    %70 = vector.load %arg11[%c0_55, %c2_56, %c0_57, %c0_58] : memref<2x10x10x128xf32, #tpu.memory_space<vmem>>, vector<2x8x8x128xf32>
    %71 = vector.extract_strided_slice %26 {offsets = [6, 0], sizes = [1, 128], strides = [1, 1]} : vector<9x128xf32> to vector<1x128xf32>
    %72 = vector.shape_cast %71 : vector<1x128xf32> to vector<128xf32>
    %73 = vector.shape_cast %72 : vector<128xf32> to vector<1x1x1x128xf32>
    %74 = vector.broadcast %73 : vector<1x1x1x128xf32> to vector<2x8x8x128xf32>
    %75 = arith.mulf %70, %74 : vector<2x8x8x128xf32>
    %76 = arith.addf %69, %75 : vector<2x8x8x128xf32>
    %c0_59 = arith.constant 0 : index
    %c2_60 = arith.constant 2 : index
    %c1_61 = arith.constant 1 : index
    %c0_62 = arith.constant 0 : index
    %77 = vector.load %arg11[%c0_59, %c2_60, %c1_61, %c0_62] : memref<2x10x10x128xf32, #tpu.memory_space<vmem>>, vector<2x8x8x128xf32>
    %78 = vector.extract_strided_slice %26 {offsets = [7, 0], sizes = [1, 128], strides = [1, 1]} : vector<9x128xf32> to vector<1x128xf32>
    %79 = vector.shape_cast %78 : vector<1x128xf32> to vector<128xf32>
    %80 = vector.shape_cast %79 : vector<128xf32> to vector<1x1x1x128xf32>
    %81 = vector.broadcast %80 : vector<1x1x1x128xf32> to vector<2x8x8x128xf32>
    %82 = arith.mulf %77, %81 : vector<2x8x8x128xf32>
    %83 = arith.addf %76, %82 : vector<2x8x8x128xf32>
    %c0_63 = arith.constant 0 : index
    %c2_64 = arith.constant 2 : index
    %c2_65 = arith.constant 2 : index
    %c0_66 = arith.constant 0 : index
    %84 = vector.load %arg11[%c0_63, %c2_64, %c2_65, %c0_66] : memref<2x10x10x128xf32, #tpu.memory_space<vmem>>, vector<2x8x8x128xf32>
    %85 = vector.extract_strided_slice %26 {offsets = [8, 0], sizes = [1, 128], strides = [1, 1]} : vector<9x128xf32> to vector<1x128xf32>
    %86 = vector.shape_cast %85 : vector<1x128xf32> to vector<128xf32>
    %87 = vector.shape_cast %86 : vector<128xf32> to vector<1x1x1x128xf32>
    %88 = vector.broadcast %87 : vector<1x1x1x128xf32> to vector<2x8x8x128xf32>
    %89 = arith.mulf %84, %88 : vector<2x8x8x128xf32>
    %90 = arith.addf %83, %89 : vector<2x8x8x128xf32>
    %c0_67 = arith.constant 0 : index
    %c0_68 = arith.constant 0 : index
    %91 = vector.load %arg5[%c0_67, %c0_68] : memref<1x128xf32, #tpu.memory_space<vmem>>, vector<1x128xf32>
    %92 = vector.shape_cast %91 : vector<1x128xf32> to vector<1x1x1x128xf32>
    %93 = vector.broadcast %92 : vector<1x1x1x128xf32> to vector<2x8x8x128xf32>
    %94 = arith.addf %90, %93 : vector<2x8x8x128xf32>
    %95 = vector.shape_cast %94 : vector<2x8x8x128xf32> to vector<128x128xf32>
    %96 = arith.truncf %95 : vector<128x128xf32> to vector<128x128xbf16>
    %cst_69 = arith.constant dense<0.000000e+00> : vector<128x128xf32>
    %97 = tpu.matmul %96, %0, %cst_69 {dimension_numbers = #tpu.dot_dimension_numbers<[1], [0], [0], [1], [0, 0, 1, 1], [], []>} : vector<128x128xbf16>, vector<128x128xbf16>, vector<128x128xf32> -> vector<128x128xf32>
    %98 = vector.broadcast %1 : vector<1x128xf32> to vector<128x128xf32>
    %99 = arith.addf %97, %98 : vector<128x128xf32>
    %100 = vector.shape_cast %99 : vector<128x128xf32> to vector<2x8x8x128xf32>
    %c0_70 = arith.constant 0 : index
    %c1_71 = arith.constant 1 : index
    %c1_72 = arith.constant 1 : index
    %c0_73 = arith.constant 0 : index
    %101 = vector.load %arg11[%c0_70, %c1_71, %c1_72, %c0_73] : memref<2x10x10x128xf32, #tpu.memory_space<vmem>>, vector<2x8x8x128xf32>
    %102 = arith.addf %100, %101 : vector<2x8x8x128xf32>
    %c0_74 = arith.constant 0 : index
    %c1_75 = arith.constant 1 : index
    %c1_76 = arith.constant 1 : index
    %c0_77 = arith.constant 0 : index
    %103 = vector.load %arg11[%c0_74, %c1_75, %c1_76, %c0_77] : memref<2x10x10x128xf32, #tpu.memory_space<vmem>>, vector<2x8x8x128xf32>
    tpu.vector_store %arg11[%c0_74, %c1_75, %c1_76, %c0_77], %102 {strides = array<i32>} : memref<2x10x10x128xf32, #tpu.memory_space<vmem>>, vector<2x8x8x128xf32>,
    %c0_78 = arith.constant 0 : index
    %c0_79 = arith.constant 0 : index
    %104 = vector.load %arg6[%c0_78, %c0_79] : memref<9x128xf32, #tpu.memory_space<vmem>>, vector<9x128xf32>
    %cst_80 = arith.constant 0.000000e+00 : f32
    %105 = vector.broadcast %cst_80 : f32 to vector<2x4x4x128xf32>
    %c0_81 = arith.constant 0 : index
    %c0_82 = arith.constant 0 : index
    %c0_83 = arith.constant 0 : index
    %c0_84 = arith.constant 0 : index
    %106 = tpu.strided_load %arg11[%c0_81, %c0_82, %c0_83, %c0_84] {strides = array<i32: 1, 2, 2, 1>} : memref<2x10x10x128xf32, #tpu.memory_space<vmem>>, vector<2x4x4x128xf32>
    %107 = vector.extract_strided_slice %104 {offsets = [0, 0], sizes = [1, 128], strides = [1, 1]} : vector<9x128xf32> to vector<1x128xf32>
    %108 = vector.shape_cast %107 : vector<1x128xf32> to vector<128xf32>
    %109 = vector.shape_cast %108 : vector<128xf32> to vector<1x1x1x128xf32>
    %110 = vector.broadcast %109 : vector<1x1x1x128xf32> to vector<2x4x4x128xf32>
    %111 = arith.mulf %106, %110 : vector<2x4x4x128xf32>
    %112 = arith.addf %105, %111 : vector<2x4x4x128xf32>
    %c0_85 = arith.constant 0 : index
    %c0_86 = arith.constant 0 : index
    %c1_87 = arith.constant 1 : index
    %c0_88 = arith.constant 0 : index
    %113 = tpu.strided_load %arg11[%c0_85, %c0_86, %c1_87, %c0_88] {strides = array<i32: 1, 2, 2, 1>} : memref<2x10x10x128xf32, #tpu.memory_space<vmem>>, vector<2x4x4x128xf32>
    %114 = vector.extract_strided_slice %104 {offsets = [1, 0], sizes = [1, 128], strides = [1, 1]} : vector<9x128xf32> to vector<1x128xf32>
    %115 = vector.shape_cast %114 : vector<1x128xf32> to vector<128xf32>
    %116 = vector.shape_cast %115 : vector<128xf32> to vector<1x1x1x128xf32>
    %117 = vector.broadcast %116 : vector<1x1x1x128xf32> to vector<2x4x4x128xf32>
    %118 = arith.mulf %113, %117 : vector<2x4x4x128xf32>
    %119 = arith.addf %112, %118 : vector<2x4x4x128xf32>
    %c0_89 = arith.constant 0 : index
    %c0_90 = arith.constant 0 : index
    %c2_91 = arith.constant 2 : index
    %c0_92 = arith.constant 0 : index
    %120 = tpu.strided_load %arg11[%c0_89, %c0_90, %c2_91, %c0_92] {strides = array<i32: 1, 2, 2, 1>} : memref<2x10x10x128xf32, #tpu.memory_space<vmem>>, vector<2x4x4x128xf32>
    %121 = vector.extract_strided_slice %104 {offsets = [2, 0], sizes = [1, 128], strides = [1, 1]} : vector<9x128xf32> to vector<1x128xf32>
    %122 = vector.shape_cast %121 : vector<1x128xf32> to vector<128xf32>
    %123 = vector.shape_cast %122 : vector<128xf32> to vector<1x1x1x128xf32>
    %124 = vector.broadcast %123 : vector<1x1x1x128xf32> to vector<2x4x4x128xf32>
    %125 = arith.mulf %120, %124 : vector<2x4x4x128xf32>
    %126 = arith.addf %119, %125 : vector<2x4x4x128xf32>
    %c0_93 = arith.constant 0 : index
    %c1_94 = arith.constant 1 : index
    %c0_95 = arith.constant 0 : index
    %c0_96 = arith.constant 0 : index
    %127 = tpu.strided_load %arg11[%c0_93, %c1_94, %c0_95, %c0_96] {strides = array<i32: 1, 2, 2, 1>} : memref<2x10x10x128xf32, #tpu.memory_space<vmem>>, vector<2x4x4x128xf32>
    %128 = vector.extract_strided_slice %104 {offsets = [3, 0], sizes = [1, 128], strides = [1, 1]} : vector<9x128xf32> to vector<1x128xf32>
    %129 = vector.shape_cast %128 : vector<1x128xf32> to vector<128xf32>
    %130 = vector.shape_cast %129 : vector<128xf32> to vector<1x1x1x128xf32>
    %131 = vector.broadcast %130 : vector<1x1x1x128xf32> to vector<2x4x4x128xf32>
    %132 = arith.mulf %127, %131 : vector<2x4x4x128xf32>
    %133 = arith.addf %126, %132 : vector<2x4x4x128xf32>
    %c0_97 = arith.constant 0 : index
    %c1_98 = arith.constant 1 : index
    %c1_99 = arith.constant 1 : index
    %c0_100 = arith.constant 0 : index
    %134 = tpu.strided_load %arg11[%c0_97, %c1_98, %c1_99, %c0_100] {strides = array<i32: 1, 2, 2, 1>} : memref<2x10x10x128xf32, #tpu.memory_space<vmem>>, vector<2x4x4x128xf32>
    %135 = vector.extract_strided_slice %104 {offsets = [4, 0], sizes = [1, 128], strides = [1, 1]} : vector<9x128xf32> to vector<1x128xf32>
    %136 = vector.shape_cast %135 : vector<1x128xf32> to vector<128xf32>
    %137 = vector.shape_cast %136 : vector<128xf32> to vector<1x1x1x128xf32>
    %138 = vector.broadcast %137 : vector<1x1x1x128xf32> to vector<2x4x4x128xf32>
    %139 = arith.mulf %134, %138 : vector<2x4x4x128xf32>
    %140 = arith.addf %133, %139 : vector<2x4x4x128xf32>
    %c0_101 = arith.constant 0 : index
    %c1_102 = arith.constant 1 : index
    %c2_103 = arith.constant 2 : index
    %c0_104 = arith.constant 0 : index
    %141 = tpu.strided_load %arg11[%c0_101, %c1_102, %c2_103, %c0_104] {strides = array<i32: 1, 2, 2, 1>} : memref<2x10x10x128xf32, #tpu.memory_space<vmem>>, vector<2x4x4x128xf32>
    %142 = vector.extract_strided_slice %104 {offsets = [5, 0], sizes = [1, 128], strides = [1, 1]} : vector<9x128xf32> to vector<1x128xf32>
    %143 = vector.shape_cast %142 : vector<1x128xf32> to vector<128xf32>
    %144 = vector.shape_cast %143 : vector<128xf32> to vector<1x1x1x128xf32>
    %145 = vector.broadcast %144 : vector<1x1x1x128xf32> to vector<2x4x4x128xf32>
    %146 = arith.mulf %141, %145 : vector<2x4x4x128xf32>
    %147 = arith.addf %140, %146 : vector<2x4x4x128xf32>
    %c0_105 = arith.constant 0 : index
    %c2_106 = arith.constant 2 : index
    %c0_107 = arith.constant 0 : index
    %c0_108 = arith.constant 0 : index
    %148 = tpu.strided_load %arg11[%c0_105, %c2_106, %c0_107, %c0_108] {strides = array<i32: 1, 2, 2, 1>} : memref<2x10x10x128xf32, #tpu.memory_space<vmem>>, vector<2x4x4x128xf32>
    %149 = vector.extract_strided_slice %104 {offsets = [6, 0], sizes = [1, 128], strides = [1, 1]} : vector<9x128xf32> to vector<1x128xf32>
    %150 = vector.shape_cast %149 : vector<1x128xf32> to vector<128xf32>
    %151 = vector.shape_cast %150 : vector<128xf32> to vector<1x1x1x128xf32>
    %152 = vector.broadcast %151 : vector<1x1x1x128xf32> to vector<2x4x4x128xf32>
    %153 = arith.mulf %148, %152 : vector<2x4x4x128xf32>
    %154 = arith.addf %147, %153 : vector<2x4x4x128xf32>
    %c0_109 = arith.constant 0 : index
    %c2_110 = arith.constant 2 : index
    %c1_111 = arith.constant 1 : index
    %c0_112 = arith.constant 0 : index
    %155 = tpu.strided_load %arg11[%c0_109, %c2_110, %c1_111, %c0_112] {strides = array<i32: 1, 2, 2, 1>} : memref<2x10x10x128xf32, #tpu.memory_space<vmem>>, vector<2x4x4x128xf32>
    %156 = vector.extract_strided_slice %104 {offsets = [7, 0], sizes = [1, 128], strides = [1, 1]} : vector<9x128xf32> to vector<1x128xf32>
    %157 = vector.shape_cast %156 : vector<1x128xf32> to vector<128xf32>
    %158 = vector.shape_cast %157 : vector<128xf32> to vector<1x1x1x128xf32>
    %159 = vector.broadcast %158 : vector<1x1x1x128xf32> to vector<2x4x4x128xf32>
    %160 = arith.mulf %155, %159 : vector<2x4x4x128xf32>
    %161 = arith.addf %154, %160 : vector<2x4x4x128xf32>
    %c0_113 = arith.constant 0 : index
    %c2_114 = arith.constant 2 : index
    %c2_115 = arith.constant 2 : index
    %c0_116 = arith.constant 0 : index
    %162 = tpu.strided_load %arg11[%c0_113, %c2_114, %c2_115, %c0_116] {strides = array<i32: 1, 2, 2, 1>} : memref<2x10x10x128xf32, #tpu.memory_space<vmem>>, vector<2x4x4x128xf32>
    %163 = vector.extract_strided_slice %104 {offsets = [8, 0], sizes = [1, 128], strides = [1, 1]} : vector<9x128xf32> to vector<1x128xf32>
    %164 = vector.shape_cast %163 : vector<1x128xf32> to vector<128xf32>
    %165 = vector.shape_cast %164 : vector<128xf32> to vector<1x1x1x128xf32>
    %166 = vector.broadcast %165 : vector<1x1x1x128xf32> to vector<2x4x4x128xf32>
    %167 = arith.mulf %162, %166 : vector<2x4x4x128xf32>
    %168 = arith.addf %161, %167 : vector<2x4x4x128xf32>
    %c0_117 = arith.constant 0 : index
    %c0_118 = arith.constant 0 : index
    %169 = vector.load %arg7[%c0_117, %c0_118] : memref<1x128xf32, #tpu.memory_space<vmem>>, vector<1x128xf32>
    %170 = vector.shape_cast %169 : vector<1x128xf32> to vector<1x1x1x128xf32>
    %171 = vector.broadcast %170 : vector<1x1x1x128xf32> to vector<2x4x4x128xf32>
    %172 = arith.addf %168, %171 : vector<2x4x4x128xf32>
    %173 = vector.shape_cast %172 : vector<2x4x4x128xf32> to vector<32x128xf32>
    %174 = arith.truncf %173 : vector<32x128xf32> to vector<32x128xbf16>
    %c0_119 = arith.constant 0 : index
    %c0_120 = arith.constant 0 : index
    %175 = vector.load %arg8[%c0_119, %c0_120] : memref<128x128xbf16, #tpu.memory_space<vmem>>, vector<128x128xbf16>
    %c0_121 = arith.constant 0 : index
    %c0_122 = arith.constant 0 : index
    %176 = vector.load %arg9[%c0_121, %c0_122] : memref<1x128xf32, #tpu.memory_space<vmem>>, vector<1x128xf32>
    %cst_123 = arith.constant dense<0.000000e+00> : vector<32x128xf32>
    %177 = tpu.matmul %174, %175, %cst_123 {dimension_numbers = #tpu.dot_dimension_numbers<[1], [0], [0], [1], [0, 0, 1, 1], [], []>} : vector<32x128xbf16>, vector<128x128xbf16>, vector<32x128xf32> -> vector<32x128xf32>
    %178 = vector.broadcast %176 : vector<1x128xf32> to vector<32x128xf32>
    %179 = arith.addf %177, %178 : vector<32x128xf32>
    %c0_124 = arith.constant 0 : index
    %c0_125 = arith.constant 0 : index
    %180 = vector.load %arg10[%c0_124, %c0_125] : memref<32x128xf32, #tpu.memory_space<vmem>>, vector<32x128xf32>
    tpu.vector_store %arg10[%c0_124, %c0_125], %179 {strides = array<i32>} : memref<32x128xf32, #tpu.memory_space<vmem>>, vector<32x128xf32>,
    return
  }
  func.func @transform_0(%arg0: i32) -> (i32, i32) {
    %c0_i32 = arith.constant 0 : i32
    %c0_i32_0 = arith.constant 0 : i32
    return %arg0, %c0_i32 : i32, i32
  }
  func.func @transform_1(%arg0: i32) -> (i32, i32) {
    %c0_i32 = arith.constant 0 : i32
    %c0_i32_0 = arith.constant 0 : i32
    %c0_i32_1 = arith.constant 0 : i32
    return %c0_i32, %c0_i32_0 : i32, i32
  }
  func.func @transform_2(%arg0: i32) -> (i32, i32) {
    %c0_i32 = arith.constant 0 : i32
    %c0_i32_0 = arith.constant 0 : i32
    %c0_i32_1 = arith.constant 0 : i32
    return %c0_i32, %c0_i32_0 : i32, i32
  }
  func.func @transform_3(%arg0: i32) -> (i32, i32) {
    %c0_i32 = arith.constant 0 : i32
    %c0_i32_0 = arith.constant 0 : i32
    %c0_i32_1 = arith.constant 0 : i32
    return %c0_i32, %c0_i32_0 : i32, i32
  }
  func.func @transform_4(%arg0: i32) -> (i32, i32) {
    %c0_i32 = arith.constant 0 : i32
    %c0_i32_0 = arith.constant 0 : i32
    %c0_i32_1 = arith.constant 0 : i32
    return %c0_i32, %c0_i32_0 : i32, i32
  }
  func.func @transform_5(%arg0: i32) -> (i32, i32) {
    %c0_i32 = arith.constant 0 : i32
    %c0_i32_0 = arith.constant 0 : i32
    %c0_i32_1 = arith.constant 0 : i32
    return %c0_i32, %c0_i32_0 : i32, i32
  }
  func.func @transform_6(%arg0: i32) -> (i32, i32) {
    %c0_i32 = arith.constant 0 : i32
    %c0_i32_0 = arith.constant 0 : i32
    %c0_i32_1 = arith.constant 0 : i32
    return %c0_i32, %c0_i32_0 : i32, i32
  }
  func.func @transform_7(%arg0: i32) -> (i32, i32) {
    %c0_i32 = arith.constant 0 : i32
    %c0_i32_0 = arith.constant 0 : i32
    %c0_i32_1 = arith.constant 0 : i32
    return %c0_i32, %c0_i32_0 : i32, i32
  }
  func.func @transform_8(%arg0: i32) -> (i32, i32) {
    %c0_i32 = arith.constant 0 : i32
    %c0_i32_0 = arith.constant 0 : i32
    %c0_i32_1 = arith.constant 0 : i32
    return %c0_i32, %c0_i32_0 : i32, i32
  }
  func.func @transform_9(%arg0: i32) -> (i32, i32) {
    %c0_i32 = arith.constant 0 : i32
    %c0_i32_0 = arith.constant 0 : i32
    return %arg0, %c0_i32 : i32, i32
  }
}

</mosaic_0001>

<llo_original>
// kernel: tpu_custom_call.1
$region0: #{tpu_custom_call.1}
  #allocation0 [shape = 'u32[]', space=smem, size = 0x4, offset = 0x4, fixed_abs, tag = 'smem constant byte address 0x4 - core index']
  #allocation1 [shape = 'u32[144,128]{1,0:T(1,128)}', space=vmem, size = 0x12000, scoped, tag = 'internal scratch']
  #allocation2 [shape = 'f32[2,10,10,128]{3,2,1,0:T(8,128)}', space=vmem, size = 0x28000, scoped, tag = 'scratch operand']
  %s0 = inlined_call_operand.hbm [shape: bf16[128,128], index: 0, kind: input, shape index: {}]
  %s1 = inlined_call_operand.hbm [shape: bf16[128,128], index: 1, kind: input, shape index: {}]
  %s2 = inlined_call_operand.vmem [shape: f32[1,128], index: 2, kind: input, shape index: {}]
  %s3 = inlined_call_operand.hbm [shape: f32[9,128], index: 3, kind: input, shape index: {}]
  %s4 = inlined_call_operand.vmem [shape: f32[1,128], index: 4, kind: input, shape index: {}]
  %s5 = inlined_call_operand.hbm [shape: f32[9,128], index: 5, kind: input, shape index: {}]
  %s6 = inlined_call_operand.vmem [shape: f32[1,128], index: 6, kind: input, shape index: {}]
  %s7 = inlined_call_operand.hbm [shape: bf16[128,128], index: 7, kind: input, shape index: {}]
  %s8 = inlined_call_operand.vmem [shape: f32[1,128], index: 8, kind: input, shape index: {}]
  %s9 = inlined_call_operand.hbm [shape: f32[32,128], index: 9, kind: output, shape index: {}]
  %s10 = sld [smem:[#allocation0]]
  $region66: #{tpu_custom_call.1} parent=0
    _
  %s12 = ssub.s32 1, %s10
  %s13 = scalar_select 0, %s12, %s10
  $region1: #{tpu_custom_call.1} parent=0
    #allocation3 [shape = 'u8[32768]{0}', space=vmem, size = 0x8000, scoped, tag = 'input window, operand 0, single buffered']
    #allocation4 [shape = 's32[1]{0}', space=sflag, size = 0x4, scoped, tag = 'scoped memory for tpu_custom_call.1']
    #allocation5 [shape = 's32[1]{0}', space=sflag, size = 0x4, scoped, tag = 'scoped memory for tpu_custom_call.1']
    #allocation6 [shape = 'u8[32768]{0}', space=vmem, size = 0x8000, scoped, tag = 'input window, operand 1, single buffered']
    #allocation7 [shape = 's32[1]{0}', space=sflag, size = 0x4, scoped, tag = 'scoped memory for tpu_custom_call.1']
    #allocation8 [shape = 'u8[8192]{0}', space=vmem, size = 0x2000, scoped, tag = 'input window, operand 3, single buffered']
    #allocation9 [shape = 'u8[8192]{0}', space=vmem, size = 0x2000, scoped, tag = 'input window, operand 5, single buffered']
    #allocation10 [shape = 's32[1]{0}', space=sflag, size = 0x4, scoped, tag = 'scoped memory for tpu_custom_call.1']
    #allocation11 [shape = 'u8[32768]{0}', space=vmem, size = 0x8000, scoped, tag = 'input window, operand 7, single buffered']
    #allocation12 [shape = 'u8[16384]{0}', space=vmem, size = 0x4000, scoped, tag = 'output window, operand 0, single buffered']
    %14 = vsyncpa [#allocation4], 0
    %15 = vsyncpa [#allocation7], 0
    %16 = vsyncpa [#allocation10], 0
    %17 = vsyncpa [#allocation5], 0
    // Predicated region
    $region2: #{tpu_custom_call.1} parent=1 // pred_check
      _
    $region3: #{tpu_custom_call.1} parent=1 // pred_check_branch
      %19 = sbr.rel (0) target = $region5
    $region4: #{tpu_custom_call.1} parent=1 // pred_region
      %s21 = ssub.s32 1024, 1024
      %22 = vsyncadd [#allocation4], %s21
      %s23 = sshll.u32 [#allocation3], 4
      %s24 = int_to_ptr.vmem [resolvable:$true] %s23
      %29 = dma.hbm_to_vmem [thread:$0]  %s0, 1024, %s24, [#allocation4], 64, 64, 4
    $region5: #{tpu_custom_call.1} parent=1 // pred_fallthru
      _
    // Predicated region
    $region6: #{tpu_custom_call.1} parent=1 // pred_check
      _
    $region7: #{tpu_custom_call.1} parent=1 // pred_check_branch
      %31 = sbr.rel (0) target = $region9
    $region8: #{tpu_custom_call.1} parent=1 // pred_region
      %s33 = ssub.s32 1024, 1024
      %34 = vsyncadd [#allocation7], %s33
      %s35 = sshll.u32 [#allocation6], 4
      %s36 = int_to_ptr.vmem [resolvable:$true] %s35
      %41 = dma.hbm_to_vmem [thread:$0]  %s1, 1024, %s36, [#allocation7], 64, 64, 4
    $region9: #{tpu_custom_call.1} parent=1 // pred_fallthru
      _
    // Predicated region
    $region10: #{tpu_custom_call.1} parent=1 // pred_check
      _
    $region11: #{tpu_custom_call.1} parent=1 // pred_check_branch
      %43 = sbr.rel (0) target = $region13
    $region12: #{tpu_custom_call.1} parent=1 // pred_region
      _
    $region13: #{tpu_custom_call.1} parent=1 // pred_fallthru
      _
    // Predicated region
    $region14: #{tpu_custom_call.1} parent=1 // pred_check
      _
    $region15: #{tpu_custom_call.1} parent=1 // pred_check_branch
      %45 = sbr.rel (0) target = $region17
    $region16: #{tpu_custom_call.1} parent=1 // pred_region
      %s47 = ssub.s32 256, 256
      %48 = vsyncadd [#allocation7], %s47
      %s49 = sshll.u32 [#allocation8], 4
      %s50 = int_to_ptr.vmem [resolvable:$true] %s49
      %55 = dma.hbm_to_vmem [thread:$0]  %s3, 256, %s50, [#allocation7], 128, 128, 8
    $region17: #{tpu_custom_call.1} parent=1 // pred_fallthru
      _
    // Predicated region
    $region18: #{tpu_custom_call.1} parent=1 // pred_check
      _
    $region19: #{tpu_custom_call.1} parent=1 // pred_check_branch
      %57 = sbr.rel (0) target = $region21
    $region20: #{tpu_custom_call.1} parent=1 // pred_region
      _
    $region21: #{tpu_custom_call.1} parent=1 // pred_fallthru
      _
    // Predicated region
    $region22: #{tpu_custom_call.1} parent=1 // pred_check
      _
    $region23: #{tpu_custom_call.1} parent=1 // pred_check_branch
      %59 = sbr.rel (0) target = $region25
    $region24: #{tpu_custom_call.1} parent=1 // pred_region
      %s61 = ssub.s32 256, 256
      %62 = vsyncadd [#allocation10], %s61
      %s63 = sshll.u32 [#allocation9], 4
      %s64 = int_to_ptr.vmem [resolvable:$true] %s63
      %69 = dma.hbm_to_vmem [thread:$0]  %s5, 256, %s64, [#allocation10], 128, 128, 8
    $region25: #{tpu_custom_call.1} parent=1 // pred_fallthru
      _
    // Predicated region
    $region26: #{tpu_custom_call.1} parent=1 // pred_check
      _
    $region27: #{tpu_custom_call.1} parent=1 // pred_check_branch
      %71 = sbr.rel (0) target = $region29
    $region28: #{tpu_custom_call.1} parent=1 // pred_region
      _
    $region29: #{tpu_custom_call.1} parent=1 // pred_fallthru
      _
    // Predicated region
    $region30: #{tpu_custom_call.1} parent=1 // pred_check
      _
    $region31: #{tpu_custom_call.1} parent=1 // pred_check_branch
      %73 = sbr.rel (0) target = $region33
    $region32: #{tpu_custom_call.1} parent=1 // pred_region
      %s75 = ssub.s32 1024, 1024
      %76 = vsyncadd [#allocation10], %s75
      %s77 = sshll.u32 [#allocation11], 4
      %s78 = int_to_ptr.vmem [resolvable:$true] %s77
      %83 = dma.hbm_to_vmem [thread:$0]  %s7, 1024, %s78, [#allocation10], 64, 64, 4
    $region33: #{tpu_custom_call.1} parent=1 // pred_fallthru
      _
    // Predicated region
    $region34: #{tpu_custom_call.1} parent=1 // pred_check
      _
    $region35: #{tpu_custom_call.1} parent=1 // pred_check_branch
      %85 = sbr.rel (0) target = $region37
    $region36: #{tpu_custom_call.1} parent=1 // pred_region
      _
    $region37: #{tpu_custom_call.1} parent=1 // pred_fallthru
      _
    // Predicated region
    $region38: #{tpu_custom_call.1} parent=1 // pred_check
      _
    $region39: #{tpu_custom_call.1} parent=1 // pred_check_branch
      %87 = sbr.rel (0) target = $region41
    $region40: #{tpu_custom_call.1} parent=1 // pred_region
      %88 = dma.done [#allocation4], 1024
    $region41: #{tpu_custom_call.1} parent=1 // pred_fallthru
      _
    // Predicated region
    $region42: #{tpu_custom_call.1} parent=1 // pred_check
      _
    $region43: #{tpu_custom_call.1} parent=1 // pred_check_branch
      %90 = sbr.rel (0) target = $region45
    $region44: #{tpu_custom_call.1} parent=1 // pred_region
      %91 = dma.done [#allocation7], 1024
    $region45: #{tpu_custom_call.1} parent=1 // pred_fallthru
      _
    // Predicated region
    $region46: #{tpu_custom_call.1} parent=1 // pred_check
      _
    $region47: #{tpu_custom_call.1} parent=1 // pred_check_branch
      %93 = sbr.rel (0) target = $region49
    $region48: #{tpu_custom_call.1} parent=1 // pred_region
      %94 = dma.done [#allocation7], 256
    $region49: #{tpu_custom_call.1} parent=1 // pred_fallthru
      _
    // Predicated region
    $region50: #{tpu_custom_call.1} parent=1 // pred_check
      _
    $region51: #{tpu_custom_call.1} parent=1 // pred_check_branch
      %96 = sbr.rel (0) target = $region53
    $region52: #{tpu_custom_call.1} parent=1 // pred_region
      %97 = dma.done [#allocation10], 256
    $region53: #{tpu_custom_call.1} parent=1 // pred_fallthru
      _
    // Predicated region
    $region54: #{tpu_custom_call.1} parent=1 // pred_check
      _
    $region55: #{tpu_custom_call.1} parent=1 // pred_check_branch
      %99 = sbr.rel (0) target = $region57
    $region56: #{tpu_custom_call.1} parent=1 // pred_region
      %100 = dma.done [#allocation10], 1024
    $region57: #{tpu_custom_call.1} parent=1 // pred_fallthru
      _
    %v102 = vld [vmem:[#allocation6] sm:$0xf]
    %v103 = vld [vmem:[#allocation6 + $0x4] sm:$0xf]
    %v104 = vld [vmem:[#allocation6 + $0x8] sm:$0xf]
    %v105 = vld [vmem:[#allocation6 + $0xc] sm:$0xf]
    %v106 = vld [vmem:[#allocation6 + $0x10] sm:$0xf]
    %v107 = vld [vmem:[#allocation6 + $0x14] sm:$0xf]
    %v108 = vld [vmem:[#allocation6 + $0x18] sm:$0xf]
    %v109 = vld [vmem:[#allocation6 + $0x1c] sm:$0xf]
    %v110 = vld [vmem:[#allocation6 + $0x20] sm:$0xf]
    %v111 = vld [vmem:[#allocation6 + $0x24] sm:$0xf]
    %v112 = vld [vmem:[#allocation6 + $0x28] sm:$0xf]
    %v113 = vld [vmem:[#allocation6 + $0x2c] sm:$0xf]
    %v114 = vld [vmem:[#allocation6 + $0x30] sm:$0xf]
    %v115 = vld [vmem:[#allocation6 + $0x34] sm:$0xf]
    %v116 = vld [vmem:[#allocation6 + $0x38] sm:$0xf]
    %v117 = vld [vmem:[#allocation6 + $0x3c] sm:$0xf]
    %v118 = vld [vmem:[%s2] sm:$0x1]
    %119 = vst [vmem:[#allocation2] sm:$0xff] 0.0
    %120 = vst [vmem:[#allocation2 + $0x8] sm:$0x3] 0.0
    %121 = vst [vmem:[#allocation2 + $0xa0] sm:$0xff] 0.0
    %122 = vst [vmem:[#allocation2 + $0xa8] sm:$0x3] 0.0
    %s123 = scalar_lea.vmem [#allocation2], 144
    %124 = vst [vmem:[%s123] sm:$0xff] 0.0
    %125 = vst [vmem:[%s123 + $0x8] sm:$0x3] 0.0
    %126 = vst [vmem:[%s123 + $0xa0] sm:$0xff] 0.0
    %127 = vst [vmem:[%s123 + $0xa8] sm:$0x3] 0.0
    %128 = vst [vmem:[#allocation2] sm:$0x1] 0.0
    %129 = vst [vmem:[#allocation2 + $0x10] sm:$0x1] 0.0
    %130 = vst [vmem:[#allocation2 + $0x20] sm:$0x1] 0.0
    %131 = vst [vmem:[#allocation2 + $0x30] sm:$0x1] 0.0
    %132 = vst [vmem:[#allocation2 + $0x40] sm:$0x1] 0.0
    %133 = vst [vmem:[#allocation2 + $0x50] sm:$0x1] 0.0
    %134 = vst [vmem:[#allocation2 + $0x60] sm:$0x1] 0.0
    %135 = vst [vmem:[#allocation2 + $0x70] sm:$0x1] 0.0
    %136 = vst [vmem:[#allocation2 + $0x80] sm:$0x1] 0.0
    %137 = vst [vmem:[#allocation2 + $0x90] sm:$0x1] 0.0
    %138 = vst [vmem:[#allocation2 + $0xa0] sm:$0x1] 0.0
    %139 = vst [vmem:[#allocation2 + $0xb0] sm:$0x1] 0.0
    %140 = vst [vmem:[#allocation2 + $0xc0] sm:$0x1] 0.0
    %141 = vst [vmem:[#allocation2 + $0xd0] sm:$0x1] 0.0
    %142 = vst [vmem:[#allocation2 + $0xe0] sm:$0x1] 0.0
    %143 = vst [vmem:[#allocation2 + $0xf0] sm:$0x1] 0.0
    %144 = vst [vmem:[#allocation2 + $0x100] sm:$0x1] 0.0
    %145 = vst [vmem:[#allocation2 + $0x110] sm:$0x1] 0.0
    %146 = vst [vmem:[#allocation2 + $0x120] sm:$0x1] 0.0
    %147 = vst [vmem:[#allocation2 + $0x130] sm:$0x1] 0.0
    %148 = vst [vmem:[#allocation2 + $0x9] sm:$0x1] 0.0
    %149 = vst [vmem:[#allocation2 + $0x19] sm:$0x1] 0.0
    %150 = vst [vmem:[#allocation2 + $0x29] sm:$0x1] 0.0
    %151 = vst [vmem:[#allocation2 + $0x39] sm:$0x1] 0.0
    %152 = vst [vmem:[#allocation2 + $0x49] sm:$0x1] 0.0
    %153 = vst [vmem:[#allocation2 + $0x59] sm:$0x1] 0.0
    %154 = vst [vmem:[#allocation2 + $0x69] sm:$0x1] 0.0
    %155 = vst [vmem:[#allocation2 + $0x79] sm:$0x1] 0.0
    %156 = vst [vmem:[#allocation2 + $0x89] sm:$0x1] 0.0
    %157 = vst [vmem:[#allocation2 + $0x99] sm:$0x1] 0.0
    %158 = vst [vmem:[#allocation2 + $0xa9] sm:$0x1] 0.0
    %159 = vst [vmem:[#allocation2 + $0xb9] sm:$0x1] 0.0
    %160 = vst [vmem:[#allocation2 + $0xc9] sm:$0x1] 0.0
    %161 = vst [vmem:[#allocation2 + $0xd9] sm:$0x1] 0.0
    %162 = vst [vmem:[#allocation2 + $0xe9] sm:$0x1] 0.0
    %163 = vst [vmem:[#allocation2 + $0xf9] sm:$0x1] 0.0
    %164 = vst [vmem:[#allocation2 + $0x109] sm:$0x1] 0.0
    %165 = vst [vmem:[#allocation2 + $0x119] sm:$0x1] 0.0
    %166 = vst [vmem:[#allocation2 + $0x129] sm:$0x1] 0.0
    %167 = vst [vmem:[#allocation2 + $0x139] sm:$0x1] 0.0
    %v168 = vld [vmem:[#allocation3] sm:$0xf]
    %v169 = vld [vmem:[#allocation3 + $0x4] sm:$0xf]
    %v170 = vld [vmem:[#allocation3 + $0x8] sm:$0xf]
    %v171 = vld [vmem:[#allocation3 + $0xc] sm:$0xf]
    %v172 = vld [vmem:[#allocation3 + $0x10] sm:$0xf]
    %v173 = vld [vmem:[#allocation3 + $0x14] sm:$0xf]
    %v174 = vld [vmem:[#allocation3 + $0x18] sm:$0xf]
    %v175 = vld [vmem:[#allocation3 + $0x1c] sm:$0xf]
    %v176 = vld [vmem:[#allocation3 + $0x20] sm:$0xf]
    %v177 = vld [vmem:[#allocation3 + $0x24] sm:$0xf]
    %v178 = vld [vmem:[#allocation3 + $0x28] sm:$0xf]
    %v179 = vld [vmem:[#allocation3 + $0x2c] sm:$0xf]
    %v180 = vld [vmem:[#allocation3 + $0x30] sm:$0xf]
    %v181 = vld [vmem:[#allocation3 + $0x34] sm:$0xf]
    %v182 = vld [vmem:[#allocation3 + $0x38] sm:$0xf]
    %v183 = vld [vmem:[#allocation3 + $0x3c] sm:$0xf]
    %v185 = vlaneseq
    %v186 = vshrl.u32 %v185, 7
    %v187 = vsub.s32 0, %v186
    %v188 = vrot.slane %v118, %v187
    %v206 = vunpack.c.l.b16 %v168
    %v207 = vunpack.c.l.b16 %v169
    %v208 = vunpack.c.l.b16 %v170
    %v209 = vunpack.c.l.b16 %v171
    %v210 = vunpack.c.l.b16 %v172
    %v211 = vunpack.c.l.b16 %v173
    %v212 = vunpack.c.l.b16 %v174
    %v213 = vunpack.c.l.b16 %v175
    %v214 = vunpack.c.l.b16 %v176
    %v215 = vunpack.c.l.b16 %v177
    %v216 = vunpack.c.l.b16 %v178
    %v217 = vunpack.c.l.b16 %v179
    %v218 = vunpack.c.l.b16 %v180
    %v219 = vunpack.c.l.b16 %v181
    %v220 = vunpack.c.l.b16 %v182
    %v221 = vunpack.c.l.b16 %v183
    %v222 = vpack.c.b16 %v207, %v206
    %v223 = vpack.c.b16 %v209, %v208
    %v224 = vpack.c.b16 %v211, %v210
    %v225 = vpack.c.b16 %v213, %v212
    %v226 = vpack.c.b16 %v215, %v214
    %v227 = vpack.c.b16 %v217, %v216
    %v228 = vpack.c.b16 %v219, %v218
    %v229 = vpack.c.b16 %v221, %v220
    %v254 = vunpack.c.l.b16 %v102
    %v255 = vunpack.c.l.b16 %v103
    %v256 = vunpack.c.l.b16 %v104
    %v257 = vunpack.c.l.b16 %v105
    %v258 = vunpack.c.l.b16 %v106
    %v259 = vunpack.c.l.b16 %v107
    %v260 = vunpack.c.l.b16 %v108
    %v261 = vunpack.c.l.b16 %v109
    %v262 = vunpack.c.l.b16 %v110
    %v263 = vunpack.c.l.b16 %v111
    %v264 = vunpack.c.l.b16 %v112
    %v265 = vunpack.c.l.b16 %v113
    %v266 = vunpack.c.l.b16 %v114
    %v267 = vunpack.c.l.b16 %v115
    %v268 = vunpack.c.l.b16 %v116
    %v269 = vunpack.c.l.b16 %v117
    %v270 = vpack.c.b16 %v255, %v254
    %v271 = vpack.c.b16 %v257, %v256
    %v272 = vpack.c.b16 %v259, %v258
    %v273 = vpack.c.b16 %v261, %v260
    %v274 = vpack.c.b16 %v263, %v262
    %v275 = vpack.c.b16 %v265, %v264
    %v276 = vpack.c.b16 %v267, %v266
    %v277 = vpack.c.b16 %v269, %v268
    %286 = vmatprep.subr.bf16.mxu0 0
    %287 = vmatpush1.bf16.msra.mxu0 %v277
    %288 = vmatprep.subr.bf16.mxu0 0
    %289 = vmatpush1.bf16.msra.mxu0 %v276
    %290 = vmatprep.subr.bf16.mxu0 0
    %291 = vmatpush1.bf16.msra.mxu0 %v275
    %292 = vmatprep.subr.bf16.mxu0 0
    %293 = vmatpush1.bf16.msra.mxu0 %v274
    %294 = vmatprep.subr.bf16.mxu0 0
    %295 = vmatpush1.bf16.msra.mxu0 %v273
    %296 = vmatprep.subr.bf16.mxu0 0
    %297 = vmatpush1.bf16.msra.mxu0 %v272
    %298 = vmatprep.subr.bf16.mxu0 0
    %299 = vmatpush1.bf16.msra.mxu0 %v271
    %300 = vmatprep.subr.bf16.mxu0 0
    %301 = vmatpush1.bf16.msra.mxu0 %v270
    %302 = vmatprep.subr.bf16.mxu0 0
    %303 = vmatpush2.bf16.msra.mxu0 0
    %304 = vmatprep.subr.bf16.mxu0 0
    %305 = vmatpush2.bf16.msra.mxu0 0
    %306 = vmatprep.subr.bf16.mxu0 0
    %307 = vmatpush2.bf16.msra.mxu0 0
    %308 = vmatprep.subr.bf16.mxu0 0
    %309 = vmatpush2.bf16.msra.mxu0 0
    %310 = vmatprep.subr.bf16.mxu0 0
    %311 = vmatpush2.bf16.msra.mxu0 0
    %312 = vmatprep.subr.bf16.mxu0 0
    %313 = vmatpush2.bf16.msra.mxu0 0
    %314 = vmatprep.subr.bf16.mxu0 0
    %315 = vmatpush2.bf16.msra.mxu0 0
    %316 = vmatprep.subr.bf16.mxu0 0
    %317 = vmatpush2.bf16.msra.mxu0 0
    %318 = vmatprep.mubr.bf16.mxu0 0
    %319 = vmatmul.mubr.bf16.gmra.mxu0 %v222
    %v320 = vpop.f32.mrf.mxu0
    %v321 = vadd.f32 %v188, %v320
    %v322 = vpop.f32.mrf.mxu0
    %v323 = vpop.f32.mrf.mxu0
    %v324 = vadd.f32 %v188, %v323
    %v325 = vpop.f32.mrf.mxu0
    %326 = vmatprep.mubr.bf16.mxu0 0
    %327 = vmatmul.mubr.bf16.gmra.mxu0 %v223
    %v328 = vpop.f32.mrf.mxu0
    %v329 = vadd.f32 %v188, %v328
    %v330 = vpop.f32.mrf.mxu0
    %v331 = vpop.f32.mrf.mxu0
    %v332 = vadd.f32 %v188, %v331
    %v333 = vpop.f32.mrf.mxu0
    %334 = vmatprep.mubr.bf16.mxu0 0
    %335 = vmatmul.mubr.bf16.gmra.mxu0 %v224
    %v336 = vpop.f32.mrf.mxu0
    %v337 = vadd.f32 %v188, %v336
    %v338 = vpop.f32.mrf.mxu0
    %v339 = vpop.f32.mrf.mxu0
    %v340 = vadd.f32 %v188, %v339
    %v341 = vpop.f32.mrf.mxu0
    %342 = vmatprep.mubr.bf16.mxu0 0
    %343 = vmatmul.mubr.bf16.gmra.mxu0 %v225
    %v344 = vpop.f32.mrf.mxu0
    %v345 = vadd.f32 %v188, %v344
    %v346 = vpop.f32.mrf.mxu0
    %v347 = vpop.f32.mrf.mxu0
    %v348 = vadd.f32 %v188, %v347
    %v349 = vpop.f32.mrf.mxu0
    %350 = vmatprep.mubr.bf16.mxu0 0
    %351 = vmatmul.mubr.bf16.gmra.mxu0 %v226
    %v352 = vpop.f32.mrf.mxu0
    %v353 = vadd.f32 %v188, %v352
    %v354 = vpop.f32.mrf.mxu0
    %v355 = vpop.f32.mrf.mxu0
    %v356 = vadd.f32 %v188, %v355
    %v357 = vpop.f32.mrf.mxu0
    %358 = vmatprep.mubr.bf16.mxu0 0
    %359 = vmatmul.mubr.bf16.gmra.mxu0 %v227
    %v360 = vpop.f32.mrf.mxu0
    %v361 = vadd.f32 %v188, %v360
    %v362 = vpop.f32.mrf.mxu0
    %v363 = vpop.f32.mrf.mxu0
    %v364 = vadd.f32 %v188, %v363
    %v365 = vpop.f32.mrf.mxu0
    %366 = vmatprep.mubr.bf16.mxu0 0
    %367 = vmatmul.mubr.bf16.gmra.mxu0 %v228
    %v368 = vpop.f32.mrf.mxu0
    %v369 = vadd.f32 %v188, %v368
    %v370 = vpop.f32.mrf.mxu0
    %v371 = vpop.f32.mrf.mxu0
    %v372 = vadd.f32 %v188, %v371
    %v373 = vpop.f32.mrf.mxu0
    %374 = vmatprep.mubr.bf16.mxu0 0
    %375 = vmatmul.mubr.bf16.gmra.mxu0 %v229
    %v376 = vpop.f32.mrf.mxu0
    %v377 = vadd.f32 %v188, %v376
    %v378 = vpop.f32.mrf.mxu0
    %v379 = vpop.f32.mrf.mxu0
    %v380 = vadd.f32 %v188, %v379
    %v381 = vpop.f32.mrf.mxu0
    %382 = vdwg.mxu0
    %v383 = vmul.f32 %v321, 0.5
    %v384 = vmul.f32 %v324, 0.5
    %v385 = vmul.f32 %v329, 0.5
    %v386 = vmul.f32 %v332, 0.5
    %v387 = vmul.f32 %v337, 0.5
    %v388 = vmul.f32 %v340, 0.5
    %v389 = vmul.f32 %v345, 0.5
    %v390 = vmul.f32 %v348, 0.5
    %v391 = vmul.f32 %v353, 0.5
    %v392 = vmul.f32 %v356, 0.5
    %v393 = vmul.f32 %v361, 0.5
    %v394 = vmul.f32 %v364, 0.5
    %v395 = vmul.f32 %v369, 0.5
    %v396 = vmul.f32 %v372, 0.5
    %v397 = vmul.f32 %v377, 0.5
    %v398 = vmul.f32 %v380, 0.5
    %v399 = vmul.f32 %v321, 0.70710677
    %v400 = vmul.f32 %v324, 0.70710677
    %v401 = vmul.f32 %v329, 0.70710677
    %v402 = vmul.f32 %v332, 0.70710677
    %v403 = vmul.f32 %v337, 0.70710677
    %v404 = vmul.f32 %v340, 0.70710677
    %v405 = vmul.f32 %v345, 0.70710677
    %v406 = vmul.f32 %v348, 0.70710677
    %v407 = vmul.f32 %v353, 0.70710677
    %v408 = vmul.f32 %v356, 0.70710677
    %v409 = vmul.f32 %v361, 0.70710677
    %v410 = vmul.f32 %v364, 0.70710677
    %v411 = vmul.f32 %v369, 0.70710677
    %v412 = vmul.f32 %v372, 0.70710677
    %v413 = vmul.f32 %v377, 0.70710677
    %v414 = vmul.f32 %v380, 0.70710677
    %v415 = verf.f32.pop %v399
    %v416 = verf.f32.pop %v400
    %v417 = verf.f32.pop %v401
    %v418 = verf.f32.pop %v402
    %v419 = verf.f32.pop %v403
    %v420 = verf.f32.pop %v404
    %v421 = verf.f32.pop %v405
    %v422 = verf.f32.pop %v406
    %v423 = verf.f32.pop %v407
    %v424 = verf.f32.pop %v408
    %v425 = verf.f32.pop %v409
    %v426 = verf.f32.pop %v410
    %v427 = verf.f32.pop %v411
    %v428 = verf.f32.pop %v412
    %v429 = verf.f32.pop %v413
    %v430 = verf.f32.pop %v414
    %v431 = vadd.f32 %v415, 1.0
    %v432 = vadd.f32 %v416, 1.0
    %v433 = vadd.f32 %v417, 1.0
    %v434 = vadd.f32 %v418, 1.0
    %v435 = vadd.f32 %v419, 1.0
    %v436 = vadd.f32 %v420, 1.0
    %v437 = vadd.f32 %v421, 1.0
    %v438 = vadd.f32 %v422, 1.0
    %v439 = vadd.f32 %v423, 1.0
    %v440 = vadd.f32 %v424, 1.0
    %v441 = vadd.f32 %v425, 1.0
    %v442 = vadd.f32 %v426, 1.0
    %v443 = vadd.f32 %v427, 1.0
    %v444 = vadd.f32 %v428, 1.0
    %v445 = vadd.f32 %v429, 1.0
    %v446 = vadd.f32 %v430, 1.0
    %v447 = vmul.f32 %v383, %v431
    %v448 = vmul.f32 %v384, %v432
    %v449 = vmul.f32 %v385, %v433
    %v450 = vmul.f32 %v386, %v434
    %v451 = vmul.f32 %v387, %v435
    %v452 = vmul.f32 %v388, %v436
    %v453 = vmul.f32 %v389, %v437
    %v454 = vmul.f32 %v390, %v438
    %v455 = vmul.f32 %v391, %v439
    %v456 = vmul.f32 %v392, %v440
    %v457 = vmul.f32 %v393, %v441
    %v458 = vmul.f32 %v394, %v442
    %v459 = vmul.f32 %v395, %v443
    %v460 = vmul.f32 %v396, %v444
    %v461 = vmul.f32 %v397, %v445
    %v462 = vmul.f32 %v398, %v446
    %v463 = vpack.c.bf16 %v448, %v447
    %v464 = vpack.c.bf16 %v450, %v449
    %v465 = vpack.c.bf16 %v452, %v451
    %v466 = vpack.c.bf16 %v454, %v453
    %v467 = vpack.c.bf16 %v456, %v455
    %v468 = vpack.c.bf16 %v458, %v457
    %v469 = vpack.c.bf16 %v460, %v459
    %v470 = vpack.c.bf16 %v462, %v461
    %471 = vmatprep.subr.bf16.mxu0 0
    %472 = vmatpush1.bf16.msra.mxu0 %v277
    %473 = vmatprep.subr.bf16.mxu0 0
    %474 = vmatpush1.bf16.msra.mxu0 %v276
    %475 = vmatprep.subr.bf16.mxu0 0
    %476 = vmatpush1.bf16.msra.mxu0 %v275
    %477 = vmatprep.subr.bf16.mxu0 0
    %478 = vmatpush1.bf16.msra.mxu0 %v274
    %479 = vmatprep.subr.bf16.mxu0 0
    %480 = vmatpush1.bf16.msra.mxu0 %v273
    %481 = vmatprep.subr.bf16.mxu0 0
    %482 = vmatpush1.bf16.msra.mxu0 %v272
    %483 = vmatprep.subr.bf16.mxu0 0
    %484 = vmatpush1.bf16.msra.mxu0 %v271
    %485 = vmatprep.subr.bf16.mxu0 0
    %486 = vmatpush1.bf16.msra.mxu0 %v270
    %487 = vmatprep.subr.bf16.mxu0 0
    %488 = vmatpush2.bf16.msra.mxu0 0
    %489 = vmatprep.subr.bf16.mxu0 0
    %490 = vmatpush2.bf16.msra.mxu0 0
    %491 = vmatprep.subr.bf16.mxu0 0
    %492 = vmatpush2.bf16.msra.mxu0 0
    %493 = vmatprep.subr.bf16.mxu0 0
    %494 = vmatpush2.bf16.msra.mxu0 0
    %495 = vmatprep.subr.bf16.mxu0 0
    %496 = vmatpush2.bf16.msra.mxu0 0
    %497 = vmatprep.subr.bf16.mxu0 0
    %498 = vmatpush2.bf16.msra.mxu0 0
    %499 = vmatprep.subr.bf16.mxu0 0
    %500 = vmatpush2.bf16.msra.mxu0 0
    %501 = vmatprep.subr.bf16.mxu0 0
    %502 = vmatpush2.bf16.msra.mxu0 0
    %503 = vmatprep.mubr.bf16.mxu0 0
    %504 = vmatmul.mubr.bf16.gmra.mxu0 %v463
    %v505 = vpop.f32.mrf.mxu0
    %v506 = vadd.f32 %v188, %v505
    %v507 = vpop.f32.mrf.mxu0
    %v508 = vpop.f32.mrf.mxu0
    %v509 = vadd.f32 %v188, %v508
    %v510 = vpop.f32.mrf.mxu0
    %511 = vmatprep.mubr.bf16.mxu0 0
    %512 = vmatmul.mubr.bf16.gmra.mxu0 %v464
    %v513 = vpop.f32.mrf.mxu0
    %v514 = vadd.f32 %v188, %v513
    %v515 = vpop.f32.mrf.mxu0
    %v516 = vpop.f32.mrf.mxu0
    %v517 = vadd.f32 %v188, %v516
    %v518 = vpop.f32.mrf.mxu0
    %519 = vmatprep.mubr.bf16.mxu0 0
    %520 = vmatmul.mubr.bf16.gmra.mxu0 %v465
    %v521 = vpop.f32.mrf.mxu0
    %v522 = vadd.f32 %v188, %v521
    %v523 = vpop.f32.mrf.mxu0
    %v524 = vpop.f32.mrf.mxu0
    %v525 = vadd.f32 %v188, %v524
    %v526 = vpop.f32.mrf.mxu0
    %527 = vmatprep.mubr.bf16.mxu0 0
    %528 = vmatmul.mubr.bf16.gmra.mxu0 %v466
    %v529 = vpop.f32.mrf.mxu0
    %v530 = vadd.f32 %v188, %v529
    %v531 = vpop.f32.mrf.mxu0
    %v532 = vpop.f32.mrf.mxu0
    %v533 = vadd.f32 %v188, %v532
    %v534 = vpop.f32.mrf.mxu0
    %535 = vmatprep.mubr.bf16.mxu0 0
    %536 = vmatmul.mubr.bf16.gmra.mxu0 %v467
    %v537 = vpop.f32.mrf.mxu0
    %v538 = vadd.f32 %v188, %v537
    %v539 = vpop.f32.mrf.mxu0
    %v540 = vpop.f32.mrf.mxu0
    %v541 = vadd.f32 %v188, %v540
    %v542 = vpop.f32.mrf.mxu0
    %543 = vmatprep.mubr.bf16.mxu0 0
    %544 = vmatmul.mubr.bf16.gmra.mxu0 %v468
    %v545 = vpop.f32.mrf.mxu0
    %v546 = vadd.f32 %v188, %v545
    %v547 = vpop.f32.mrf.mxu0
    %v548 = vpop.f32.mrf.mxu0
    %v549 = vadd.f32 %v188, %v548
    %v550 = vpop.f32.mrf.mxu0
    %551 = vmatprep.mubr.bf16.mxu0 0
    %552 = vmatmul.mubr.bf16.gmra.mxu0 %v469
    %v553 = vpop.f32.mrf.mxu0
    %v554 = vadd.f32 %v188, %v553
    %v555 = vpop.f32.mrf.mxu0
    %v556 = vpop.f32.mrf.mxu0
    %v557 = vadd.f32 %v188, %v556
    %v558 = vpop.f32.mrf.mxu0
    %559 = vmatprep.mubr.bf16.mxu0 0
    %560 = vmatmul.mubr.bf16.gmra.mxu0 %v470
    %v561 = vpop.f32.mrf.mxu0
    %v562 = vadd.f32 %v188, %v561
    %v563 = vpop.f32.mrf.mxu0
    %v564 = vpop.f32.mrf.mxu0
    %v565 = vadd.f32 %v188, %v564
    %v566 = vpop.f32.mrf.mxu0
    %567 = vdwg.mxu0
    %s568 = scalar_lea.vmem [#allocation2], 16
    %569 = vst [vmem:[%s568 + $0x1] sm:$0xff] %v506
    %570 = vst [vmem:[%s568 + $0x11] sm:$0xff] %v509
    %571 = vst [vmem:[%s568 + $0x21] sm:$0xff] %v514
    %572 = vst [vmem:[%s568 + $0x31] sm:$0xff] %v517
    %573 = vst [vmem:[%s568 + $0x41] sm:$0xff] %v522
    %574 = vst [vmem:[%s568 + $0x51] sm:$0xff] %v525
    %575 = vst [vmem:[%s568 + $0x61] sm:$0xff] %v530
    %576 = vst [vmem:[%s568 + $0x71] sm:$0xff] %v533
    %577 = vst [vmem:[%s568 + $0xa1] sm:$0xff] %v538
    %578 = vst [vmem:[%s568 + $0xb1] sm:$0xff] %v541
    %579 = vst [vmem:[%s568 + $0xc1] sm:$0xff] %v546
    %580 = vst [vmem:[%s568 + $0xd1] sm:$0xff] %v549
    %581 = vst [vmem:[%s568 + $0xe1] sm:$0xff] %v554
    %582 = vst [vmem:[%s568 + $0xf1] sm:$0xff] %v557
    %583 = vst [vmem:[%s568 + $0x101] sm:$0xff] %v562
    %584 = vst [vmem:[%s568 + $0x111] sm:$0xff] %v565
    %v585 = vld [vmem:[#allocation8] sm:$0xff]
    %v586 = vld [vmem:[#allocation8 + $0x8] sm:$0x1]
    %v587 = vld [vmem:[#allocation2] sm:$0xff]
    %v588 = vld [vmem:[#allocation2 + $0x10] sm:$0xff]
    %v589 = vld [vmem:[#allocation2 + $0x20] sm:$0xff]
    %v590 = vld [vmem:[#allocation2 + $0x30] sm:$0xff]
    %v591 = vld [vmem:[#allocation2 + $0x40] sm:$0xff]
    %v592 = vld [vmem:[#allocation2 + $0x50] sm:$0xff]
    %v593 = vld [vmem:[#allocation2 + $0x60] sm:$0xff]
    %v594 = vld [vmem:[#allocation2 + $0x70] sm:$0xff]
    %v595 = vld [vmem:[#allocation2 + $0xa0] sm:$0xff]
    %v596 = vld [vmem:[#allocation2 + $0xb0] sm:$0xff]
    %v597 = vld [vmem:[#allocation2 + $0xc0] sm:$0xff]
    %v598 = vld [vmem:[#allocation2 + $0xd0] sm:$0xff]
    %v599 = vld [vmem:[#allocation2 + $0xe0] sm:$0xff]
    %v600 = vld [vmem:[#allocation2 + $0xf0] sm:$0xff]
    %v601 = vld [vmem:[#allocation2 + $0x100] sm:$0xff]
    %v602 = vld [vmem:[#allocation2 + $0x110] sm:$0xff]
    %v603 = vlaneseq
    %v604 = vshrl.u32 %v603, 7
    %v605 = vsub.s32 0, %v604
    %v606 = vrot.slane %v585, %v605
    %v607 = vmul.f32 %v587, %v606
    %v608 = vmul.f32 %v588, %v606
    %v609 = vmul.f32 %v589, %v606
    %v610 = vmul.f32 %v590, %v606
    %v611 = vmul.f32 %v591, %v606
    %v612 = vmul.f32 %v592, %v606
    %v613 = vmul.f32 %v593, %v606
    %v614 = vmul.f32 %v594, %v606
    %v615 = vmul.f32 %v595, %v606
    %v616 = vmul.f32 %v596, %v606
    %v617 = vmul.f32 %v597, %v606
    %v618 = vmul.f32 %v598, %v606
    %v619 = vmul.f32 %v599, %v606
    %v620 = vmul.f32 %v600, %v606
    %v621 = vmul.f32 %v601, %v606
    %v622 = vmul.f32 %v602, %v606
    %v623 = vadd.f32 %v607, 0.0
    %v624 = vadd.f32 %v608, 0.0
    %v625 = vadd.f32 %v609, 0.0
    %v626 = vadd.f32 %v610, 0.0
    %v627 = vadd.f32 %v611, 0.0
    %v628 = vadd.f32 %v612, 0.0
    %v629 = vadd.f32 %v613, 0.0
    %v630 = vadd.f32 %v614, 0.0
    %v631 = vadd.f32 %v615, 0.0
    %v632 = vadd.f32 %v616, 0.0
    %v633 = vadd.f32 %v617, 0.0
    %v634 = vadd.f32 %v618, 0.0
    %v635 = vadd.f32 %v619, 0.0
    %v636 = vadd.f32 %v620, 0.0
    %v637 = vadd.f32 %v621, 0.0
    %v638 = vadd.f32 %v622, 0.0
    %v639 = vld [vmem:[#allocation2 + $0x1] sm:$0xff]
    %v640 = vld [vmem:[#allocation2 + $0x11] sm:$0xff]
    %v641 = vld [vmem:[#allocation2 + $0x21] sm:$0xff]
    %v642 = vld [vmem:[#allocation2 + $0x31] sm:$0xff]
    %v643 = vld [vmem:[#allocation2 + $0x41] sm:$0xff]
    %v644 = vld [vmem:[#allocation2 + $0x51] sm:$0xff]
    %v645 = vld [vmem:[#allocation2 + $0x61] sm:$0xff]
    %v646 = vld [vmem:[#allocation2 + $0x71] sm:$0xff]
    %v647 = vld [vmem:[#allocation2 + $0xa1] sm:$0xff]
    %v648 = vld [vmem:[#allocation2 + $0xb1] sm:$0xff]
    %v649 = vld [vmem:[#allocation2 + $0xc1] sm:$0xff]
    %v650 = vld [vmem:[#allocation2 + $0xd1] sm:$0xff]
    %v651 = vld [vmem:[#allocation2 + $0xe1] sm:$0xff]
    %v652 = vld [vmem:[#allocation2 + $0xf1] sm:$0xff]
    %v653 = vld [vmem:[#allocation2 + $0x101] sm:$0xff]
    %v654 = vld [vmem:[#allocation2 + $0x111] sm:$0xff]
    %v655 = vlaneseq
    %v656 = vshrl.u32 %v655, 7
    %v657 = vsub.s32 1, %v656
    %v658 = vrot.slane %v585, %v657
    %v659 = vmul.f32 %v639, %v658
    %v660 = vmul.f32 %v640, %v658
    %v661 = vmul.f32 %v641, %v658
    %v662 = vmul.f32 %v642, %v658
    %v663 = vmul.f32 %v643, %v658
    %v664 = vmul.f32 %v644, %v658
    %v665 = vmul.f32 %v645, %v658
    %v666 = vmul.f32 %v646, %v658
    %v667 = vmul.f32 %v647, %v658
    %v668 = vmul.f32 %v648, %v658
    %v669 = vmul.f32 %v649, %v658
    %v670 = vmul.f32 %v650, %v658
    %v671 = vmul.f32 %v651, %v658
    %v672 = vmul.f32 %v652, %v658
    %v673 = vmul.f32 %v653, %v658
    %v674 = vmul.f32 %v654, %v658
    %v675 = vadd.f32 %v623, %v659
    %v676 = vadd.f32 %v624, %v660
    %v677 = vadd.f32 %v625, %v661
    %v678 = vadd.f32 %v626, %v662
    %v679 = vadd.f32 %v627, %v663
    %v680 = vadd.f32 %v628, %v664
    %v681 = vadd.f32 %v629, %v665
    %v682 = vadd.f32 %v630, %v666
    %v683 = vadd.f32 %v631, %v667
    %v684 = vadd.f32 %v632, %v668
    %v685 = vadd.f32 %v633, %v669
    %v686 = vadd.f32 %v634, %v670
    %v687 = vadd.f32 %v635, %v671
    %v688 = vadd.f32 %v636, %v672
    %v689 = vadd.f32 %v637, %v673
    %v690 = vadd.f32 %v638, %v674
    %v691 = vld [vmem:[#allocation2 + $0x2] sm:$0xff]
    %v692 = vld [vmem:[#allocation2 + $0x12] sm:$0xff]
    %v693 = vld [vmem:[#allocation2 + $0x22] sm:$0xff]
    %v694 = vld [vmem:[#allocation2 + $0x32] sm:$0xff]
    %v695 = vld [vmem:[#allocation2 + $0x42] sm:$0xff]
    %v696 = vld [vmem:[#allocation2 + $0x52] sm:$0xff]
    %v697 = vld [vmem:[#allocation2 + $0x62] sm:$0xff]
    %v698 = vld [vmem:[#allocation2 + $0x72] sm:$0xff]
    %v699 = vld [vmem:[#allocation2 + $0xa2] sm:$0xff]
    %v700 = vld [vmem:[#allocation2 + $0xb2] sm:$0xff]
    %v701 = vld [vmem:[#allocation2 + $0xc2] sm:$0xff]
    %v702 = vld [vmem:[#allocation2 + $0xd2] sm:$0xff]
    %v703 = vld [vmem:[#allocation2 + $0xe2] sm:$0xff]
    %v704 = vld [vmem:[#allocation2 + $0xf2] sm:$0xff]
    %v705 = vld [vmem:[#allocation2 + $0x102] sm:$0xff]
    %v706 = vld [vmem:[#allocation2 + $0x112] sm:$0xff]
    %v707 = vlaneseq
    %v708 = vshrl.u32 %v707, 7
    %v709 = vsub.s32 2, %v708
    %v710 = vrot.slane %v585, %v709
    %v711 = vmul.f32 %v691, %v710
    %v712 = vmul.f32 %v692, %v710
    %v713 = vmul.f32 %v693, %v710
    %v714 = vmul.f32 %v694, %v710
    %v715 = vmul.f32 %v695, %v710
    %v716 = vmul.f32 %v696, %v710
    %v717 = vmul.f32 %v697, %v710
    %v718 = vmul.f32 %v698, %v710
    %v719 = vmul.f32 %v699, %v710
    %v720 = vmul.f32 %v700, %v710
    %v721 = vmul.f32 %v701, %v710
    %v722 = vmul.f32 %v702, %v710
    %v723 = vmul.f32 %v703, %v710
    %v724 = vmul.f32 %v704, %v710
    %v725 = vmul.f32 %v705, %v710
    %v726 = vmul.f32 %v706, %v710
    %v727 = vadd.f32 %v675, %v711
    %v728 = vadd.f32 %v676, %v712
    %v729 = vadd.f32 %v677, %v713
    %v730 = vadd.f32 %v678, %v714
    %v731 = vadd.f32 %v679, %v715
    %v732 = vadd.f32 %v680, %v716
    %v733 = vadd.f32 %v681, %v717
    %v734 = vadd.f32 %v682, %v718
    %v735 = vadd.f32 %v683, %v719
    %v736 = vadd.f32 %v684, %v720
    %v737 = vadd.f32 %v685, %v721
    %v738 = vadd.f32 %v686, %v722
    %v739 = vadd.f32 %v687, %v723
    %v740 = vadd.f32 %v688, %v724
    %v741 = vadd.f32 %v689, %v725
    %v742 = vadd.f32 %v690, %v726
    %v743 = vld [vmem:[%s568] sm:$0xff]
    %v744 = vld [vmem:[%s568 + $0x10] sm:$0xff]
    %v745 = vld [vmem:[%s568 + $0x20] sm:$0xff]
    %v746 = vld [vmem:[%s568 + $0x30] sm:$0xff]
    %v747 = vld [vmem:[%s568 + $0x40] sm:$0xff]
    %v748 = vld [vmem:[%s568 + $0x50] sm:$0xff]
    %v749 = vld [vmem:[%s568 + $0x60] sm:$0xff]
    %v750 = vld [vmem:[%s568 + $0x70] sm:$0xff]
    %v751 = vld [vmem:[%s568 + $0xa0] sm:$0xff]
    %v752 = vld [vmem:[%s568 + $0xb0] sm:$0xff]
    %v753 = vld [vmem:[%s568 + $0xc0] sm:$0xff]
    %v754 = vld [vmem:[%s568 + $0xd0] sm:$0xff]
    %v755 = vld [vmem:[%s568 + $0xe0] sm:$0xff]
    %v756 = vld [vmem:[%s568 + $0xf0] sm:$0xff]
    %v757 = vld [vmem:[%s568 + $0x100] sm:$0xff]
    %v758 = vld [vmem:[%s568 + $0x110] sm:$0xff]
    %v759 = vlaneseq
    %v760 = vshrl.u32 %v759, 7
    %v761 = vsub.s32 3, %v760
    %v762 = vrot.slane %v585, %v761
    %v763 = vmul.f32 %v743, %v762
    %v764 = vmul.f32 %v744, %v762
    %v765 = vmul.f32 %v745, %v762
    %v766 = vmul.f32 %v746, %v762
    %v767 = vmul.f32 %v747, %v762
    %v768 = vmul.f32 %v748, %v762
    %v769 = vmul.f32 %v749, %v762
    %v770 = vmul.f32 %v750, %v762
    %v771 = vmul.f32 %v751, %v762
    %v772 = vmul.f32 %v752, %v762
    %v773 = vmul.f32 %v753, %v762
    %v774 = vmul.f32 %v754, %v762
    %v775 = vmul.f32 %v755, %v762
    %v776 = vmul.f32 %v756, %v762
    %v777 = vmul.f32 %v757, %v762
    %v778 = vmul.f32 %v758, %v762
    %v779 = vadd.f32 %v727, %v763
    %v780 = vadd.f32 %v728, %v764
    %v781 = vadd.f32 %v729, %v765
    %v782 = vadd.f32 %v730, %v766
    %v783 = vadd.f32 %v731, %v767
    %v784 = vadd.f32 %v732, %v768
    %v785 = vadd.f32 %v733, %v769
    %v786 = vadd.f32 %v734, %v770
    %v787 = vadd.f32 %v735, %v771
    %v788 = vadd.f32 %v736, %v772
    %v789 = vadd.f32 %v737, %v773
    %v790 = vadd.f32 %v738, %v774
    %v791 = vadd.f32 %v739, %v775
    %v792 = vadd.f32 %v740, %v776
    %v793 = vadd.f32 %v741, %v777
    %v794 = vadd.f32 %v742, %v778
    %v795 = vld [vmem:[%s568 + $0x1] sm:$0xff]
    %v796 = vld [vmem:[%s568 + $0x11] sm:$0xff]
    %v797 = vld [vmem:[%s568 + $0x21] sm:$0xff]
    %v798 = vld [vmem:[%s568 + $0x31] sm:$0xff]
    %v799 = vld [vmem:[%s568 + $0x41] sm:$0xff]
    %v800 = vld [vmem:[%s568 + $0x51] sm:$0xff]
    %v801 = vld [vmem:[%s568 + $0x61] sm:$0xff]
    %v802 = vld [vmem:[%s568 + $0x71] sm:$0xff]
    %v803 = vld [vmem:[%s568 + $0xa1] sm:$0xff]
    %v804 = vld [vmem:[%s568 + $0xb1] sm:$0xff]
    %v805 = vld [vmem:[%s568 + $0xc1] sm:$0xff]
    %v806 = vld [vmem:[%s568 + $0xd1] sm:$0xff]
    %v807 = vld [vmem:[%s568 + $0xe1] sm:$0xff]
    %v808 = vld [vmem:[%s568 + $0xf1] sm:$0xff]
    %v809 = vld [vmem:[%s568 + $0x101] sm:$0xff]
    %v810 = vld [vmem:[%s568 + $0x111] sm:$0xff]
    %v811 = vlaneseq
    %v812 = vshrl.u32 %v811, 7
    %v813 = vsub.s32 4, %v812
    %v814 = vrot.slane %v585, %v813
    %v815 = vmul.f32 %v795, %v814
    %v816 = vmul.f32 %v796, %v814
    %v817 = vmul.f32 %v797, %v814
    %v818 = vmul.f32 %v798, %v814
    %v819 = vmul.f32 %v799, %v814
    %v820 = vmul.f32 %v800, %v814
    %v821 = vmul.f32 %v801, %v814
    %v822 = vmul.f32 %v802, %v814
    %v823 = vmul.f32 %v803, %v814
    %v824 = vmul.f32 %v804, %v814
    %v825 = vmul.f32 %v805, %v814
    %v826 = vmul.f32 %v806, %v814
    %v827 = vmul.f32 %v807, %v814
    %v828 = vmul.f32 %v808, %v814
    %v829 = vmul.f32 %v809, %v814
    %v830 = vmul.f32 %v810, %v814
    %v831 = vadd.f32 %v779, %v815
    %v832 = vadd.f32 %v780, %v816
    %v833 = vadd.f32 %v781, %v817
    %v834 = vadd.f32 %v782, %v818
    %v835 = vadd.f32 %v783, %v819
    %v836 = vadd.f32 %v784, %v820
    %v837 = vadd.f32 %v785, %v821
    %v838 = vadd.f32 %v786, %v822
    %v839 = vadd.f32 %v787, %v823
    %v840 = vadd.f32 %v788, %v824
    %v841 = vadd.f32 %v789, %v825
    %v842 = vadd.f32 %v790, %v826
    %v843 = vadd.f32 %v791, %v827
    %v844 = vadd.f32 %v792, %v828
    %v845 = vadd.f32 %v793, %v829
    %v846 = vadd.f32 %v794, %v830
    %v847 = vld [vmem:[%s568 + $0x2] sm:$0xff]
    %v848 = vld [vmem:[%s568 + $0x12] sm:$0xff]
    %v849 = vld [vmem:[%s568 + $0x22] sm:$0xff]
    %v850 = vld [vmem:[%s568 + $0x32] sm:$0xff]
    %v851 = vld [vmem:[%s568 + $0x42] sm:$0xff]
    %v852 = vld [vmem:[%s568 + $0x52] sm:$0xff]
    %v853 = vld [vmem:[%s568 + $0x62] sm:$0xff]
    %v854 = vld [vmem:[%s568 + $0x72] sm:$0xff]
    %v855 = vld [vmem:[%s568 + $0xa2] sm:$0xff]
    %v856 = vld [vmem:[%s568 + $0xb2] sm:$0xff]
    %v857 = vld [vmem:[%s568 + $0xc2] sm:$0xff]
    %v858 = vld [vmem:[%s568 + $0xd2] sm:$0xff]
    %v859 = vld [vmem:[%s568 + $0xe2] sm:$0xff]
    %v860 = vld [vmem:[%s568 + $0xf2] sm:$0xff]
    %v861 = vld [vmem:[%s568 + $0x102] sm:$0xff]
    %v862 = vld [vmem:[%s568 + $0x112] sm:$0xff]
    %v863 = vlaneseq
    %v864 = vshrl.u32 %v863, 7
    %v865 = vsub.s32 5, %v864
    %v866 = vrot.slane %v585, %v865
    %v867 = vmul.f32 %v847, %v866
    %v868 = vmul.f32 %v848, %v866
    %v869 = vmul.f32 %v849, %v866
    %v870 = vmul.f32 %v850, %v866
    %v871 = vmul.f32 %v851, %v866
    %v872 = vmul.f32 %v852, %v866
    %v873 = vmul.f32 %v853, %v866
    %v874 = vmul.f32 %v854, %v866
    %v875 = vmul.f32 %v855, %v866
    %v876 = vmul.f32 %v856, %v866
    %v877 = vmul.f32 %v857, %v866
    %v878 = vmul.f32 %v858, %v866
    %v879 = vmul.f32 %v859, %v866
    %v880 = vmul.f32 %v860, %v866
    %v881 = vmul.f32 %v861, %v866
    %v882 = vmul.f32 %v862, %v866
    %v883 = vadd.f32 %v831, %v867
    %v884 = vadd.f32 %v832, %v868
    %v885 = vadd.f32 %v833, %v869
    %v886 = vadd.f32 %v834, %v870
    %v887 = vadd.f32 %v835, %v871
    %v888 = vadd.f32 %v836, %v872
    %v889 = vadd.f32 %v837, %v873
    %v890 = vadd.f32 %v838, %v874
    %v891 = vadd.f32 %v839, %v875
    %v892 = vadd.f32 %v840, %v876
    %v893 = vadd.f32 %v841, %v877
    %v894 = vadd.f32 %v842, %v878
    %v895 = vadd.f32 %v843, %v879
    %v896 = vadd.f32 %v844, %v880
    %v897 = vadd.f32 %v845, %v881
    %v898 = vadd.f32 %v846, %v882
    %s899 = scalar_lea.vmem [#allocation2], 32
    %v900 = vld [vmem:[%s899] sm:$0xff]
    %v901 = vld [vmem:[%s899 + $0x10] sm:$0xff]
    %v902 = vld [vmem:[%s899 + $0x20] sm:$0xff]
    %v903 = vld [vmem:[%s899 + $0x30] sm:$0xff]
    %v904 = vld [vmem:[%s899 + $0x40] sm:$0xff]
    %v905 = vld [vmem:[%s899 + $0x50] sm:$0xff]
    %v906 = vld [vmem:[%s899 + $0x60] sm:$0xff]
    %v907 = vld [vmem:[%s899 + $0x70] sm:$0xff]
    %v908 = vld [vmem:[%s899 + $0xa0] sm:$0xff]
    %v909 = vld [vmem:[%s899 + $0xb0] sm:$0xff]
    %v910 = vld [vmem:[%s899 + $0xc0] sm:$0xff]
    %v911 = vld [vmem:[%s899 + $0xd0] sm:$0xff]
    %v912 = vld [vmem:[%s899 + $0xe0] sm:$0xff]
    %v913 = vld [vmem:[%s899 + $0xf0] sm:$0xff]
    %v914 = vld [vmem:[%s899 + $0x100] sm:$0xff]
    %v915 = vld [vmem:[%s899 + $0x110] sm:$0xff]
    %v916 = vlaneseq
    %v917 = vshrl.u32 %v916, 7
    %v918 = vsub.s32 6, %v917
    %v919 = vrot.slane %v585, %v918
    %v920 = vmul.f32 %v900, %v919
    %v921 = vmul.f32 %v901, %v919
    %v922 = vmul.f32 %v902, %v919
    %v923 = vmul.f32 %v903, %v919
    %v924 = vmul.f32 %v904, %v919
    %v925 = vmul.f32 %v905, %v919
    %v926 = vmul.f32 %v906, %v919
    %v927 = vmul.f32 %v907, %v919
    %v928 = vmul.f32 %v908, %v919
    %v929 = vmul.f32 %v909, %v919
    %v930 = vmul.f32 %v910, %v919
    %v931 = vmul.f32 %v911, %v919
    %v932 = vmul.f32 %v912, %v919
    %v933 = vmul.f32 %v913, %v919
    %v934 = vmul.f32 %v914, %v919
    %v935 = vmul.f32 %v915, %v919
    %v936 = vadd.f32 %v883, %v920
    %v937 = vadd.f32 %v884, %v921
    %v938 = vadd.f32 %v885, %v922
    %v939 = vadd.f32 %v886, %v923
    %v940 = vadd.f32 %v887, %v924
    %v941 = vadd.f32 %v888, %v925
    %v942 = vadd.f32 %v889, %v926
    %v943 = vadd.f32 %v890, %v927
    %v944 = vadd.f32 %v891, %v928
    %v945 = vadd.f32 %v892, %v929
    %v946 = vadd.f32 %v893, %v930
    %v947 = vadd.f32 %v894, %v931
    %v948 = vadd.f32 %v895, %v932
    %v949 = vadd.f32 %v896, %v933
    %v950 = vadd.f32 %v897, %v934
    %v951 = vadd.f32 %v898, %v935
    %v952 = vld [vmem:[%s899 + $0x1] sm:$0xff]
    %v953 = vld [vmem:[%s899 + $0x11] sm:$0xff]
    %v954 = vld [vmem:[%s899 + $0x21] sm:$0xff]
    %v955 = vld [vmem:[%s899 + $0x31] sm:$0xff]
    %v956 = vld [vmem:[%s899 + $0x41] sm:$0xff]
    %v957 = vld [vmem:[%s899 + $0x51] sm:$0xff]
    %v958 = vld [vmem:[%s899 + $0x61] sm:$0xff]
    %v959 = vld [vmem:[%s899 + $0x71] sm:$0xff]
    %v960 = vld [vmem:[%s899 + $0xa1] sm:$0xff]
    %v961 = vld [vmem:[%s899 + $0xb1] sm:$0xff]
    %v962 = vld [vmem:[%s899 + $0xc1] sm:$0xff]
    %v963 = vld [vmem:[%s899 + $0xd1] sm:$0xff]
    %v964 = vld [vmem:[%s899 + $0xe1] sm:$0xff]
    %v965 = vld [vmem:[%s899 + $0xf1] sm:$0xff]
    %v966 = vld [vmem:[%s899 + $0x101] sm:$0xff]
    %v967 = vld [vmem:[%s899 + $0x111] sm:$0xff]
    %v968 = vlaneseq
    %v969 = vshrl.u32 %v968, 7
    %v970 = vsub.s32 7, %v969
    %v971 = vrot.slane %v585, %v970
    %v972 = vmul.f32 %v952, %v971
    %v973 = vmul.f32 %v953, %v971
    %v974 = vmul.f32 %v954, %v971
    %v975 = vmul.f32 %v955, %v971
    %v976 = vmul.f32 %v956, %v971
    %v977 = vmul.f32 %v957, %v971
    %v978 = vmul.f32 %v958, %v971
    %v979 = vmul.f32 %v959, %v971
    %v980 = vmul.f32 %v960, %v971
    %v981 = vmul.f32 %v961, %v971
    %v982 = vmul.f32 %v962, %v971
    %v983 = vmul.f32 %v963, %v971
    %v984 = vmul.f32 %v964, %v971
    %v985 = vmul.f32 %v965, %v971
    %v986 = vmul.f32 %v966, %v971
    %v987 = vmul.f32 %v967, %v971
    %v988 = vadd.f32 %v936, %v972
    %v989 = vadd.f32 %v937, %v973
    %v990 = vadd.f32 %v938, %v974
    %v991 = vadd.f32 %v939, %v975
    %v992 = vadd.f32 %v940, %v976
    %v993 = vadd.f32 %v941, %v977
    %v994 = vadd.f32 %v942, %v978
    %v995 = vadd.f32 %v943, %v979
    %v996 = vadd.f32 %v944, %v980
    %v997 = vadd.f32 %v945, %v981
    %v998 = vadd.f32 %v946, %v982
    %v999 = vadd.f32 %v947, %v983
    %v1000 = vadd.f32 %v948, %v984
    %v1001 = vadd.f32 %v949, %v985
    %v1002 = vadd.f32 %v950, %v986
    %v1003 = vadd.f32 %v951, %v987
    %v1004 = vld [vmem:[%s899 + $0x2] sm:$0xff]
    %v1005 = vld [vmem:[%s899 + $0x12] sm:$0xff]
    %v1006 = vld [vmem:[%s899 + $0x22] sm:$0xff]
    %v1007 = vld [vmem:[%s899 + $0x32] sm:$0xff]
    %v1008 = vld [vmem:[%s899 + $0x42] sm:$0xff]
    %v1009 = vld [vmem:[%s899 + $0x52] sm:$0xff]
    %v1010 = vld [vmem:[%s899 + $0x62] sm:$0xff]
    %v1011 = vld [vmem:[%s899 + $0x72] sm:$0xff]
    %v1012 = vld [vmem:[%s899 + $0xa2] sm:$0xff]
    %v1013 = vld [vmem:[%s899 + $0xb2] sm:$0xff]
    %v1014 = vld [vmem:[%s899 + $0xc2] sm:$0xff]
    %v1015 = vld [vmem:[%s899 + $0xd2] sm:$0xff]
    %v1016 = vld [vmem:[%s899 + $0xe2] sm:$0xff]
    %v1017 = vld [vmem:[%s899 + $0xf2] sm:$0xff]
    %v1018 = vld [vmem:[%s899 + $0x102] sm:$0xff]
    %v1019 = vld [vmem:[%s899 + $0x112] sm:$0xff]
    %v1020 = vlaneseq
    %v1021 = vshrl.u32 %v1020, 7
    %v1022 = vsub.s32 0, %v1021
    %v1023 = vrot.slane %v586, %v1022
    %v1024 = vmul.f32 %v1004, %v1023
    %v1025 = vmul.f32 %v1005, %v1023
    %v1026 = vmul.f32 %v1006, %v1023
    %v1027 = vmul.f32 %v1007, %v1023
    %v1028 = vmul.f32 %v1008, %v1023
    %v1029 = vmul.f32 %v1009, %v1023
    %v1030 = vmul.f32 %v1010, %v1023
    %v1031 = vmul.f32 %v1011, %v1023
    %v1032 = vmul.f32 %v1012, %v1023
    %v1033 = vmul.f32 %v1013, %v1023
    %v1034 = vmul.f32 %v1014, %v1023
    %v1035 = vmul.f32 %v1015, %v1023
    %v1036 = vmul.f32 %v1016, %v1023
    %v1037 = vmul.f32 %v1017, %v1023
    %v1038 = vmul.f32 %v1018, %v1023
    %v1039 = vmul.f32 %v1019, %v1023
    %v1040 = vadd.f32 %v988, %v1024
    %v1041 = vadd.f32 %v989, %v1025
    %v1042 = vadd.f32 %v990, %v1026
    %v1043 = vadd.f32 %v991, %v1027
    %v1044 = vadd.f32 %v992, %v1028
    %v1045 = vadd.f32 %v993, %v1029
    %v1046 = vadd.f32 %v994, %v1030
    %v1047 = vadd.f32 %v995, %v1031
    %v1048 = vadd.f32 %v996, %v1032
    %v1049 = vadd.f32 %v997, %v1033
    %v1050 = vadd.f32 %v998, %v1034
    %v1051 = vadd.f32 %v999, %v1035
    %v1052 = vadd.f32 %v1000, %v1036
    %v1053 = vadd.f32 %v1001, %v1037
    %v1054 = vadd.f32 %v1002, %v1038
    %v1055 = vadd.f32 %v1003, %v1039
    %v1056 = vld [vmem:[%s4] sm:$0x1]
    %v1058 = vlaneseq
    %v1059 = vshrl.u32 %v1058, 7
    %v1060 = vsub.s32 0, %v1059
    %v1061 = vrot.slane %v1056, %v1060
    %v1063 = vadd.f32 %v1040, %v1061
    %v1064 = vadd.f32 %v1041, %v1061
    %v1065 = vadd.f32 %v1042, %v1061
    %v1066 = vadd.f32 %v1043, %v1061
    %v1067 = vadd.f32 %v1044, %v1061
    %v1068 = vadd.f32 %v1045, %v1061
    %v1069 = vadd.f32 %v1046, %v1061
    %v1070 = vadd.f32 %v1047, %v1061
    %v1071 = vadd.f32 %v1048, %v1061
    %v1072 = vadd.f32 %v1049, %v1061
    %v1073 = vadd.f32 %v1050, %v1061
    %v1074 = vadd.f32 %v1051, %v1061
    %v1075 = vadd.f32 %v1052, %v1061
    %v1076 = vadd.f32 %v1053, %v1061
    %v1077 = vadd.f32 %v1054, %v1061
    %v1078 = vadd.f32 %v1055, %v1061
    %v1079 = vpack.c.bf16 %v1064, %v1063
    %v1080 = vpack.c.bf16 %v1066, %v1065
    %v1081 = vpack.c.bf16 %v1068, %v1067
    %v1082 = vpack.c.bf16 %v1070, %v1069
    %v1083 = vpack.c.bf16 %v1072, %v1071
    %v1084 = vpack.c.bf16 %v1074, %v1073
    %v1085 = vpack.c.bf16 %v1076, %v1075
    %v1086 = vpack.c.bf16 %v1078, %v1077
    %1087 = vmatprep.subr.bf16.mxu0 0
    %1088 = vmatpush1.bf16.msra.mxu0 %v277
    %1089 = vmatprep.subr.bf16.mxu0 0
    %1090 = vmatpush1.bf16.msra.mxu0 %v276
    %1091 = vmatprep.subr.bf16.mxu0 0
    %1092 = vmatpush1.bf16.msra.mxu0 %v275
    %1093 = vmatprep.subr.bf16.mxu0 0
    %1094 = vmatpush1.bf16.msra.mxu0 %v274
    %1095 = vmatprep.subr.bf16.mxu0 0
    %1096 = vmatpush1.bf16.msra.mxu0 %v273
    %1097 = vmatprep.subr.bf16.mxu0 0
    %1098 = vmatpush1.bf16.msra.mxu0 %v272
    %1099 = vmatprep.subr.bf16.mxu0 0
    %1100 = vmatpush1.bf16.msra.mxu0 %v271
    %1101 = vmatprep.subr.bf16.mxu0 0
    %1102 = vmatpush1.bf16.msra.mxu0 %v270
    %1103 = vmatprep.subr.bf16.mxu0 0
    %1104 = vmatpush2.bf16.msra.mxu0 0
    %1105 = vmatprep.subr.bf16.mxu0 0
    %1106 = vmatpush2.bf16.msra.mxu0 0
    %1107 = vmatprep.subr.bf16.mxu0 0
    %1108 = vmatpush2.bf16.msra.mxu0 0
    %1109 = vmatprep.subr.bf16.mxu0 0
    %1110 = vmatpush2.bf16.msra.mxu0 0
    %1111 = vmatprep.subr.bf16.mxu0 0
    %1112 = vmatpush2.bf16.msra.mxu0 0
    %1113 = vmatprep.subr.bf16.mxu0 0
    %1114 = vmatpush2.bf16.msra.mxu0 0
    %1115 = vmatprep.subr.bf16.mxu0 0
    %1116 = vmatpush2.bf16.msra.mxu0 0
    %1117 = vmatprep.subr.bf16.mxu0 0
    %1118 = vmatpush2.bf16.msra.mxu0 0
    %1119 = vmatprep.mubr.bf16.mxu0 0
    %1120 = vmatmul.mubr.bf16.gmra.mxu0 %v1079
    %v1121 = vpop.f32.mrf.mxu0
    %v1122 = vadd.f32 %v188, %v1121
    %v1123 = vpop.f32.mrf.mxu0
    %v1124 = vpop.f32.mrf.mxu0
    %v1125 = vadd.f32 %v188, %v1124
    %v1126 = vpop.f32.mrf.mxu0
    %1127 = vmatprep.mubr.bf16.mxu0 0
    %1128 = vmatmul.mubr.bf16.gmra.mxu0 %v1080
    %v1129 = vpop.f32.mrf.mxu0
    %v1130 = vadd.f32 %v188, %v1129
    %v1131 = vpop.f32.mrf.mxu0
    %v1132 = vpop.f32.mrf.mxu0
    %v1133 = vadd.f32 %v188, %v1132
    %v1134 = vpop.f32.mrf.mxu0
    %1135 = vmatprep.mubr.bf16.mxu0 0
    %1136 = vmatmul.mubr.bf16.gmra.mxu0 %v1081
    %v1137 = vpop.f32.mrf.mxu0
    %v1138 = vadd.f32 %v188, %v1137
    %v1139 = vpop.f32.mrf.mxu0
    %v1140 = vpop.f32.mrf.mxu0
    %v1141 = vadd.f32 %v188, %v1140
    %v1142 = vpop.f32.mrf.mxu0
    %1143 = vmatprep.mubr.bf16.mxu0 0
    %1144 = vmatmul.mubr.bf16.gmra.mxu0 %v1082
    %v1145 = vpop.f32.mrf.mxu0
    %v1146 = vadd.f32 %v188, %v1145
    %v1147 = vpop.f32.mrf.mxu0
    %v1148 = vpop.f32.mrf.mxu0
    %v1149 = vadd.f32 %v188, %v1148
    %v1150 = vpop.f32.mrf.mxu0
    %1151 = vmatprep.mubr.bf16.mxu0 0
    %1152 = vmatmul.mubr.bf16.gmra.mxu0 %v1083
    %v1153 = vpop.f32.mrf.mxu0
    %v1154 = vadd.f32 %v188, %v1153
    %v1155 = vpop.f32.mrf.mxu0
    %v1156 = vpop.f32.mrf.mxu0
    %v1157 = vadd.f32 %v188, %v1156
    %v1158 = vpop.f32.mrf.mxu0
    %1159 = vmatprep.mubr.bf16.mxu0 0
    %1160 = vmatmul.mubr.bf16.gmra.mxu0 %v1084
    %v1161 = vpop.f32.mrf.mxu0
    %v1162 = vadd.f32 %v188, %v1161
    %v1163 = vpop.f32.mrf.mxu0
    %v1164 = vpop.f32.mrf.mxu0
    %v1165 = vadd.f32 %v188, %v1164
    %v1166 = vpop.f32.mrf.mxu0
    %1167 = vmatprep.mubr.bf16.mxu0 0
    %1168 = vmatmul.mubr.bf16.gmra.mxu0 %v1085
    %v1169 = vpop.f32.mrf.mxu0
    %v1170 = vadd.f32 %v188, %v1169
    %v1171 = vpop.f32.mrf.mxu0
    %v1172 = vpop.f32.mrf.mxu0
    %v1173 = vadd.f32 %v188, %v1172
    %v1174 = vpop.f32.mrf.mxu0
    %1175 = vmatprep.mubr.bf16.mxu0 0
    %1176 = vmatmul.mubr.bf16.gmra.mxu0 %v1086
    %v1177 = vpop.f32.mrf.mxu0
    %v1178 = vadd.f32 %v188, %v1177
    %v1179 = vpop.f32.mrf.mxu0
    %v1180 = vpop.f32.mrf.mxu0
    %v1181 = vadd.f32 %v188, %v1180
    %v1182 = vpop.f32.mrf.mxu0
    %1183 = vdwg.mxu0
    %v1184 = vadd.f32 %v1122, %v795
    %v1185 = vadd.f32 %v1125, %v796
    %v1186 = vadd.f32 %v1130, %v797
    %v1187 = vadd.f32 %v1133, %v798
    %v1188 = vadd.f32 %v1138, %v799
    %v1189 = vadd.f32 %v1141, %v800
    %v1190 = vadd.f32 %v1146, %v801
    %v1191 = vadd.f32 %v1149, %v802
    %v1192 = vadd.f32 %v1154, %v803
    %v1193 = vadd.f32 %v1157, %v804
    %v1194 = vadd.f32 %v1162, %v805
    %v1195 = vadd.f32 %v1165, %v806
    %v1196 = vadd.f32 %v1170, %v807
    %v1197 = vadd.f32 %v1173, %v808
    %v1198 = vadd.f32 %v1178, %v809
    %v1199 = vadd.f32 %v1181, %v810
    %1200 = vst [vmem:[%s568 + $0x1] sm:$0xff] %v1184
    %1201 = vst [vmem:[%s568 + $0x11] sm:$0xff] %v1185
    %1202 = vst [vmem:[%s568 + $0x21] sm:$0xff] %v1186
    %1203 = vst [vmem:[%s568 + $0x31] sm:$0xff] %v1187
    %1204 = vst [vmem:[%s568 + $0x41] sm:$0xff] %v1188
    %1205 = vst [vmem:[%s568 + $0x51] sm:$0xff] %v1189
    %1206 = vst [vmem:[%s568 + $0x61] sm:$0xff] %v1190
    %1207 = vst [vmem:[%s568 + $0x71] sm:$0xff] %v1191
    %1208 = vst [vmem:[%s568 + $0xa1] sm:$0xff] %v1192
    %1209 = vst [vmem:[%s568 + $0xb1] sm:$0xff] %v1193
    %1210 = vst [vmem:[%s568 + $0xc1] sm:$0xff] %v1194
    %1211 = vst [vmem:[%s568 + $0xd1] sm:$0xff] %v1195
    %1212 = vst [vmem:[%s568 + $0xe1] sm:$0xff] %v1196
    %1213 = vst [vmem:[%s568 + $0xf1] sm:$0xff] %v1197
    %1214 = vst [vmem:[%s568 + $0x101] sm:$0xff] %v1198
    %1215 = vst [vmem:[%s568 + $0x111] sm:$0xff] %v1199
    %v1216 = vld [vmem:[#allocation9] sm:$0xff]
    %v1217 = vld [vmem:[#allocation9 + $0x8] sm:$0x1]
    %v1218 = vld [vmem:[#allocation2] ss:$2 sm:$0xf]
    %s1219 = scalar_lea.vmem [#allocation2], 32
    %v1220 = vld [vmem:[%s1219] ss:$2 sm:$0xf]
    %s1221 = scalar_lea.vmem [#allocation2], 64
    %v1222 = vld [vmem:[%s1221] ss:$2 sm:$0xf]
    %s1223 = scalar_lea.vmem [#allocation2], 96
    %v1224 = vld [vmem:[%s1223] ss:$2 sm:$0xf]
    %s1225 = scalar_lea.vmem [#allocation2], 160
    %v1226 = vld [vmem:[%s1225] ss:$2 sm:$0xf]
    %s1227 = scalar_lea.vmem [#allocation2], 192
    %v1228 = vld [vmem:[%s1227] ss:$2 sm:$0xf]
    %s1229 = scalar_lea.vmem [#allocation2], 224
    %v1230 = vld [vmem:[%s1229] ss:$2 sm:$0xf]
    %s1231 = scalar_lea.vmem [#allocation2], 256
    %v1232 = vld [vmem:[%s1231] ss:$2 sm:$0xf]
    %v1233 = vlaneseq
    %v1234 = vshrl.u32 %v1233, 7
    %v1235 = vsub.s32 0, %v1234
    %v1236 = vrot.slane %v1216, %v1235
    %v1237 = vmul.f32 %v1218, %v1236
    %v1238 = vmul.f32 %v1220, %v1236
    %v1239 = vmul.f32 %v1222, %v1236
    %v1240 = vmul.f32 %v1224, %v1236
    %v1241 = vmul.f32 %v1226, %v1236
    %v1242 = vmul.f32 %v1228, %v1236
    %v1243 = vmul.f32 %v1230, %v1236
    %v1244 = vmul.f32 %v1232, %v1236
    %v1245 = vadd.f32 %v1237, 0.0
    %v1246 = vadd.f32 %v1238, 0.0
    %v1247 = vadd.f32 %v1239, 0.0
    %v1248 = vadd.f32 %v1240, 0.0
    %v1249 = vadd.f32 %v1241, 0.0
    %v1250 = vadd.f32 %v1242, 0.0
    %v1251 = vadd.f32 %v1243, 0.0
    %v1252 = vadd.f32 %v1244, 0.0
    %s1253 = scalar_lea.vmem [#allocation2], 1
    %v1254 = vld [vmem:[%s1253] ss:$2 sm:$0xf]
    %s1255 = scalar_lea.vmem [#allocation2], 33
    %v1256 = vld [vmem:[%s1255] ss:$2 sm:$0xf]
    %s1257 = scalar_lea.vmem [#allocation2], 65
    %v1258 = vld [vmem:[%s1257] ss:$2 sm:$0xf]
    %s1259 = scalar_lea.vmem [#allocation2], 97
    %v1260 = vld [vmem:[%s1259] ss:$2 sm:$0xf]
    %s1261 = scalar_lea.vmem [#allocation2], 161
    %v1262 = vld [vmem:[%s1261] ss:$2 sm:$0xf]
    %s1263 = scalar_lea.vmem [#allocation2], 193
    %v1264 = vld [vmem:[%s1263] ss:$2 sm:$0xf]
    %s1265 = scalar_lea.vmem [#allocation2], 225
    %v1266 = vld [vmem:[%s1265] ss:$2 sm:$0xf]
    %s1267 = scalar_lea.vmem [#allocation2], 257
    %v1268 = vld [vmem:[%s1267] ss:$2 sm:$0xf]
    %v1269 = vlaneseq
    %v1270 = vshrl.u32 %v1269, 7
    %v1271 = vsub.s32 1, %v1270
    %v1272 = vrot.slane %v1216, %v1271
    %v1273 = vmul.f32 %v1254, %v1272
    %v1274 = vmul.f32 %v1256, %v1272
    %v1275 = vmul.f32 %v1258, %v1272
    %v1276 = vmul.f32 %v1260, %v1272
    %v1277 = vmul.f32 %v1262, %v1272
    %v1278 = vmul.f32 %v1264, %v1272
    %v1279 = vmul.f32 %v1266, %v1272
    %v1280 = vmul.f32 %v1268, %v1272
    %v1281 = vadd.f32 %v1245, %v1273
    %v1282 = vadd.f32 %v1246, %v1274
    %v1283 = vadd.f32 %v1247, %v1275
    %v1284 = vadd.f32 %v1248, %v1276
    %v1285 = vadd.f32 %v1249, %v1277
    %v1286 = vadd.f32 %v1250, %v1278
    %v1287 = vadd.f32 %v1251, %v1279
    %v1288 = vadd.f32 %v1252, %v1280
    %s1289 = scalar_lea.vmem [#allocation2], 2
    %v1290 = vld [vmem:[%s1289] ss:$2 sm:$0xf]
    %s1291 = scalar_lea.vmem [#allocation2], 34
    %v1292 = vld [vmem:[%s1291] ss:$2 sm:$0xf]
    %s1293 = scalar_lea.vmem [#allocation2], 66
    %v1294 = vld [vmem:[%s1293] ss:$2 sm:$0xf]
    %s1295 = scalar_lea.vmem [#allocation2], 98
    %v1296 = vld [vmem:[%s1295] ss:$2 sm:$0xf]
    %s1297 = scalar_lea.vmem [#allocation2], 162
    %v1298 = vld [vmem:[%s1297] ss:$2 sm:$0xf]
    %s1299 = scalar_lea.vmem [#allocation2], 194
    %v1300 = vld [vmem:[%s1299] ss:$2 sm:$0xf]
    %s1301 = scalar_lea.vmem [#allocation2], 226
    %v1302 = vld [vmem:[%s1301] ss:$2 sm:$0xf]
    %s1303 = scalar_lea.vmem [#allocation2], 258
    %v1304 = vld [vmem:[%s1303] ss:$2 sm:$0xf]
    %v1305 = vlaneseq
    %v1306 = vshrl.u32 %v1305, 7
    %v1307 = vsub.s32 2, %v1306
    %v1308 = vrot.slane %v1216, %v1307
    %v1309 = vmul.f32 %v1290, %v1308
    %v1310 = vmul.f32 %v1292, %v1308
    %v1311 = vmul.f32 %v1294, %v1308
    %v1312 = vmul.f32 %v1296, %v1308
    %v1313 = vmul.f32 %v1298, %v1308
    %v1314 = vmul.f32 %v1300, %v1308
    %v1315 = vmul.f32 %v1302, %v1308
    %v1316 = vmul.f32 %v1304, %v1308
    %v1317 = vadd.f32 %v1281, %v1309
    %v1318 = vadd.f32 %v1282, %v1310
    %v1319 = vadd.f32 %v1283, %v1311
    %v1320 = vadd.f32 %v1284, %v1312
    %v1321 = vadd.f32 %v1285, %v1313
    %v1322 = vadd.f32 %v1286, %v1314
    %v1323 = vadd.f32 %v1287, %v1315
    %v1324 = vadd.f32 %v1288, %v1316
    %v1325 = vld [vmem:[%s568] ss:$2 sm:$0xf]
    %s1326 = scalar_lea.vmem %s568, 32 [#allocation2]
    %v1327 = vld [vmem:[%s1326] ss:$2 sm:$0xf]
    %s1328 = scalar_lea.vmem %s568, 64 [#allocation2]
    %v1329 = vld [vmem:[%s1328] ss:$2 sm:$0xf]
    %s1330 = scalar_lea.vmem %s568, 96 [#allocation2]
    %v1331 = vld [vmem:[%s1330] ss:$2 sm:$0xf]
    %s1332 = scalar_lea.vmem %s568, 160 [#allocation2]
    %v1333 = vld [vmem:[%s1332] ss:$2 sm:$0xf]
    %s1334 = scalar_lea.vmem %s568, 192 [#allocation2]
    %v1335 = vld [vmem:[%s1334] ss:$2 sm:$0xf]
    %s1336 = scalar_lea.vmem %s568, 224 [#allocation2]
    %v1337 = vld [vmem:[%s1336] ss:$2 sm:$0xf]
    %s1338 = scalar_lea.vmem %s568, 256 [#allocation2]
    %v1339 = vld [vmem:[%s1338] ss:$2 sm:$0xf]
    %v1340 = vlaneseq
    %v1341 = vshrl.u32 %v1340, 7
    %v1342 = vsub.s32 3, %v1341
    %v1343 = vrot.slane %v1216, %v1342
    %v1344 = vmul.f32 %v1325, %v1343
    %v1345 = vmul.f32 %v1327, %v1343
    %v1346 = vmul.f32 %v1329, %v1343
    %v1347 = vmul.f32 %v1331, %v1343
    %v1348 = vmul.f32 %v1333, %v1343
    %v1349 = vmul.f32 %v1335, %v1343
    %v1350 = vmul.f32 %v1337, %v1343
    %v1351 = vmul.f32 %v1339, %v1343
    %v1352 = vadd.f32 %v1317, %v1344
    %v1353 = vadd.f32 %v1318, %v1345
    %v1354 = vadd.f32 %v1319, %v1346
    %v1355 = vadd.f32 %v1320, %v1347
    %v1356 = vadd.f32 %v1321, %v1348
    %v1357 = vadd.f32 %v1322, %v1349
    %v1358 = vadd.f32 %v1323, %v1350
    %v1359 = vadd.f32 %v1324, %v1351
    %s1360 = scalar_lea.vmem %s568, 1 [#allocation2]
    %v1361 = vld [vmem:[%s1360] ss:$2 sm:$0xf]
    %s1362 = scalar_lea.vmem %s568, 33 [#allocation2]
    %v1363 = vld [vmem:[%s1362] ss:$2 sm:$0xf]
    %s1364 = scalar_lea.vmem %s568, 65 [#allocation2]
    %v1365 = vld [vmem:[%s1364] ss:$2 sm:$0xf]
    %s1366 = scalar_lea.vmem %s568, 97 [#allocation2]
    %v1367 = vld [vmem:[%s1366] ss:$2 sm:$0xf]
    %s1368 = scalar_lea.vmem %s568, 161 [#allocation2]
    %v1369 = vld [vmem:[%s1368] ss:$2 sm:$0xf]
    %s1370 = scalar_lea.vmem %s568, 193 [#allocation2]
    %v1371 = vld [vmem:[%s1370] ss:$2 sm:$0xf]
    %s1372 = scalar_lea.vmem %s568, 225 [#allocation2]
    %v1373 = vld [vmem:[%s1372] ss:$2 sm:$0xf]
    %s1374 = scalar_lea.vmem %s568, 257 [#allocation2]
    %v1375 = vld [vmem:[%s1374] ss:$2 sm:$0xf]
    %v1376 = vlaneseq
    %v1377 = vshrl.u32 %v1376, 7
    %v1378 = vsub.s32 4, %v1377
    %v1379 = vrot.slane %v1216, %v1378
    %v1380 = vmul.f32 %v1361, %v1379
    %v1381 = vmul.f32 %v1363, %v1379
    %v1382 = vmul.f32 %v1365, %v1379
    %v1383 = vmul.f32 %v1367, %v1379
    %v1384 = vmul.f32 %v1369, %v1379
    %v1385 = vmul.f32 %v1371, %v1379
    %v1386 = vmul.f32 %v1373, %v1379
    %v1387 = vmul.f32 %v1375, %v1379
    %v1388 = vadd.f32 %v1352, %v1380
    %v1389 = vadd.f32 %v1353, %v1381
    %v1390 = vadd.f32 %v1354, %v1382
    %v1391 = vadd.f32 %v1355, %v1383
    %v1392 = vadd.f32 %v1356, %v1384
    %v1393 = vadd.f32 %v1357, %v1385
    %v1394 = vadd.f32 %v1358, %v1386
    %v1395 = vadd.f32 %v1359, %v1387
    %s1396 = scalar_lea.vmem %s568, 2 [#allocation2]
    %v1397 = vld [vmem:[%s1396] ss:$2 sm:$0xf]
    %s1398 = scalar_lea.vmem %s568, 34 [#allocation2]
    %v1399 = vld [vmem:[%s1398] ss:$2 sm:$0xf]
    %s1400 = scalar_lea.vmem %s568, 66 [#allocation2]
    %v1401 = vld [vmem:[%s1400] ss:$2 sm:$0xf]
    %s1402 = scalar_lea.vmem %s568, 98 [#allocation2]
    %v1403 = vld [vmem:[%s1402] ss:$2 sm:$0xf]
    %s1404 = scalar_lea.vmem %s568, 162 [#allocation2]
    %v1405 = vld [vmem:[%s1404] ss:$2 sm:$0xf]
    %s1406 = scalar_lea.vmem %s568, 194 [#allocation2]
    %v1407 = vld [vmem:[%s1406] ss:$2 sm:$0xf]
    %s1408 = scalar_lea.vmem %s568, 226 [#allocation2]
    %v1409 = vld [vmem:[%s1408] ss:$2 sm:$0xf]
    %s1410 = scalar_lea.vmem %s568, 258 [#allocation2]
    %v1411 = vld [vmem:[%s1410] ss:$2 sm:$0xf]
    %v1412 = vlaneseq
    %v1413 = vshrl.u32 %v1412, 7
    %v1414 = vsub.s32 5, %v1413
    %v1415 = vrot.slane %v1216, %v1414
    %v1416 = vmul.f32 %v1397, %v1415
    %v1417 = vmul.f32 %v1399, %v1415
    %v1418 = vmul.f32 %v1401, %v1415
    %v1419 = vmul.f32 %v1403, %v1415
    %v1420 = vmul.f32 %v1405, %v1415
    %v1421 = vmul.f32 %v1407, %v1415
    %v1422 = vmul.f32 %v1409, %v1415
    %v1423 = vmul.f32 %v1411, %v1415
    %v1424 = vadd.f32 %v1388, %v1416
    %v1425 = vadd.f32 %v1389, %v1417
    %v1426 = vadd.f32 %v1390, %v1418
    %v1427 = vadd.f32 %v1391, %v1419
    %v1428 = vadd.f32 %v1392, %v1420
    %v1429 = vadd.f32 %v1393, %v1421
    %v1430 = vadd.f32 %v1394, %v1422
    %v1431 = vadd.f32 %v1395, %v1423
    %v1432 = vld [vmem:[%s899] ss:$2 sm:$0xf]
    %s1433 = scalar_lea.vmem %s899, 32 [#allocation2]
    %v1434 = vld [vmem:[%s1433] ss:$2 sm:$0xf]
    %s1435 = scalar_lea.vmem %s899, 64 [#allocation2]
    %v1436 = vld [vmem:[%s1435] ss:$2 sm:$0xf]
    %s1437 = scalar_lea.vmem %s899, 96 [#allocation2]
    %v1438 = vld [vmem:[%s1437] ss:$2 sm:$0xf]
    %s1439 = scalar_lea.vmem %s899, 160 [#allocation2]
    %v1440 = vld [vmem:[%s1439] ss:$2 sm:$0xf]
    %s1441 = scalar_lea.vmem %s899, 192 [#allocation2]
    %v1442 = vld [vmem:[%s1441] ss:$2 sm:$0xf]
    %s1443 = scalar_lea.vmem %s899, 224 [#allocation2]
    %v1444 = vld [vmem:[%s1443] ss:$2 sm:$0xf]
    %s1445 = scalar_lea.vmem %s899, 256 [#allocation2]
    %v1446 = vld [vmem:[%s1445] ss:$2 sm:$0xf]
    %v1447 = vlaneseq
    %v1448 = vshrl.u32 %v1447, 7
    %v1449 = vsub.s32 6, %v1448
    %v1450 = vrot.slane %v1216, %v1449
    %v1451 = vmul.f32 %v1432, %v1450
    %v1452 = vmul.f32 %v1434, %v1450
    %v1453 = vmul.f32 %v1436, %v1450
    %v1454 = vmul.f32 %v1438, %v1450
    %v1455 = vmul.f32 %v1440, %v1450
    %v1456 = vmul.f32 %v1442, %v1450
    %v1457 = vmul.f32 %v1444, %v1450
    %v1458 = vmul.f32 %v1446, %v1450
    %v1459 = vadd.f32 %v1424, %v1451
    %v1460 = vadd.f32 %v1425, %v1452
    %v1461 = vadd.f32 %v1426, %v1453
    %v1462 = vadd.f32 %v1427, %v1454
    %v1463 = vadd.f32 %v1428, %v1455
    %v1464 = vadd.f32 %v1429, %v1456
    %v1465 = vadd.f32 %v1430, %v1457
    %v1466 = vadd.f32 %v1431, %v1458
    %s1467 = scalar_lea.vmem %s899, 1 [#allocation2]
    %v1468 = vld [vmem:[%s1467] ss:$2 sm:$0xf]
    %s1469 = scalar_lea.vmem %s899, 33 [#allocation2]
    %v1470 = vld [vmem:[%s1469] ss:$2 sm:$0xf]
    %s1471 = scalar_lea.vmem %s899, 65 [#allocation2]
    %v1472 = vld [vmem:[%s1471] ss:$2 sm:$0xf]
    %s1473 = scalar_lea.vmem %s899, 97 [#allocation2]
    %v1474 = vld [vmem:[%s1473] ss:$2 sm:$0xf]
    %s1475 = scalar_lea.vmem %s899, 161 [#allocation2]
    %v1476 = vld [vmem:[%s1475] ss:$2 sm:$0xf]
    %s1477 = scalar_lea.vmem %s899, 193 [#allocation2]
    %v1478 = vld [vmem:[%s1477] ss:$2 sm:$0xf]
    %s1479 = scalar_lea.vmem %s899, 225 [#allocation2]
    %v1480 = vld [vmem:[%s1479] ss:$2 sm:$0xf]
    %s1481 = scalar_lea.vmem %s899, 257 [#allocation2]
    %v1482 = vld [vmem:[%s1481] ss:$2 sm:$0xf]
    %v1483 = vlaneseq
    %v1484 = vshrl.u32 %v1483, 7
    %v1485 = vsub.s32 7, %v1484
    %v1486 = vrot.slane %v1216, %v1485
    %v1487 = vmul.f32 %v1468, %v1486
    %v1488 = vmul.f32 %v1470, %v1486
    %v1489 = vmul.f32 %v1472, %v1486
    %v1490 = vmul.f32 %v1474, %v1486
    %v1491 = vmul.f32 %v1476, %v1486
    %v1492 = vmul.f32 %v1478, %v1486
    %v1493 = vmul.f32 %v1480, %v1486
    %v1494 = vmul.f32 %v1482, %v1486
    %v1495 = vadd.f32 %v1459, %v1487
    %v1496 = vadd.f32 %v1460, %v1488
    %v1497 = vadd.f32 %v1461, %v1489
    %v1498 = vadd.f32 %v1462, %v1490
    %v1499 = vadd.f32 %v1463, %v1491
    %v1500 = vadd.f32 %v1464, %v1492
    %v1501 = vadd.f32 %v1465, %v1493
    %v1502 = vadd.f32 %v1466, %v1494
    %s1503 = scalar_lea.vmem %s899, 2 [#allocation2]
    %v1504 = vld [vmem:[%s1503] ss:$2 sm:$0xf]
    %s1505 = scalar_lea.vmem %s899, 34 [#allocation2]
    %v1506 = vld [vmem:[%s1505] ss:$2 sm:$0xf]
    %s1507 = scalar_lea.vmem %s899, 66 [#allocation2]
    %v1508 = vld [vmem:[%s1507] ss:$2 sm:$0xf]
    %s1509 = scalar_lea.vmem %s899, 98 [#allocation2]
    %v1510 = vld [vmem:[%s1509] ss:$2 sm:$0xf]
    %s1511 = scalar_lea.vmem %s899, 162 [#allocation2]
    %v1512 = vld [vmem:[%s1511] ss:$2 sm:$0xf]
    %s1513 = scalar_lea.vmem %s899, 194 [#allocation2]
    %v1514 = vld [vmem:[%s1513] ss:$2 sm:$0xf]
    %s1515 = scalar_lea.vmem %s899, 226 [#allocation2]
    %v1516 = vld [vmem:[%s1515] ss:$2 sm:$0xf]
    %s1517 = scalar_lea.vmem %s899, 258 [#allocation2]
    %v1518 = vld [vmem:[%s1517] ss:$2 sm:$0xf]
    %v1519 = vlaneseq
    %v1520 = vshrl.u32 %v1519, 7
    %v1521 = vsub.s32 0, %v1520
    %v1522 = vrot.slane %v1217, %v1521
    %v1523 = vmul.f32 %v1504, %v1522
    %v1524 = vmul.f32 %v1506, %v1522
    %v1525 = vmul.f32 %v1508, %v1522
    %v1526 = vmul.f32 %v1510, %v1522
    %v1527 = vmul.f32 %v1512, %v1522
    %v1528 = vmul.f32 %v1514, %v1522
    %v1529 = vmul.f32 %v1516, %v1522
    %v1530 = vmul.f32 %v1518, %v1522
    %v1531 = vadd.f32 %v1495, %v1523
    %v1532 = vadd.f32 %v1496, %v1524
    %v1533 = vadd.f32 %v1497, %v1525
    %v1534 = vadd.f32 %v1498, %v1526
    %v1535 = vadd.f32 %v1499, %v1527
    %v1536 = vadd.f32 %v1500, %v1528
    %v1537 = vadd.f32 %v1501, %v1529
    %v1538 = vadd.f32 %v1502, %v1530
    %v1539 = vld [vmem:[%s6] sm:$0x1]
    %v1541 = vlaneseq
    %v1542 = vshrl.u32 %v1541, 7
    %v1543 = vsub.s32 0, %v1542
    %v1544 = vrot.slane %v1539, %v1543
    %v1546 = vadd.f32 %v1531, %v1544
    %v1547 = vadd.f32 %v1532, %v1544
    %v1548 = vadd.f32 %v1533, %v1544
    %v1549 = vadd.f32 %v1534, %v1544
    %v1550 = vadd.f32 %v1535, %v1544
    %v1551 = vadd.f32 %v1536, %v1544
    %v1552 = vadd.f32 %v1537, %v1544
    %v1553 = vadd.f32 %v1538, %v1544
    %v1562 = vcombine.low %v1546, %v1547
    %v1563 = vcombine.low %v1548, %v1549
    %v1564 = vcombine.low %v1550, %v1551
    %v1565 = vcombine.low %v1552, %v1553
    %v1570 = vpack.c.bf16 %v1563, %v1562
    %v1571 = vpack.c.bf16 %v1565, %v1564
    %v1572 = vld [vmem:[#allocation11] sm:$0xf]
    %v1573 = vld [vmem:[#allocation11 + $0x4] sm:$0xf]
    %v1574 = vld [vmem:[#allocation11 + $0x8] sm:$0xf]
    %v1575 = vld [vmem:[#allocation11 + $0xc] sm:$0xf]
    %v1576 = vld [vmem:[#allocation11 + $0x10] sm:$0xf]
    %v1577 = vld [vmem:[#allocation11 + $0x14] sm:$0xf]
    %v1578 = vld [vmem:[#allocation11 + $0x18] sm:$0xf]
    %v1579 = vld [vmem:[#allocation11 + $0x1c] sm:$0xf]
    %v1580 = vld [vmem:[#allocation11 + $0x20] sm:$0xf]
    %v1581 = vld [vmem:[#allocation11 + $0x24] sm:$0xf]
    %v1582 = vld [vmem:[#allocation11 + $0x28] sm:$0xf]
    %v1583 = vld [vmem:[#allocation11 + $0x2c] sm:$0xf]
    %v1584 = vld [vmem:[#allocation11 + $0x30] sm:$0xf]
    %v1585 = vld [vmem:[#allocation11 + $0x34] sm:$0xf]
    %v1586 = vld [vmem:[#allocation11 + $0x38] sm:$0xf]
    %v1587 = vld [vmem:[#allocation11 + $0x3c] sm:$0xf]
    %v1588 = vld [vmem:[%s8] sm:$0x1]
    %v1590 = vlaneseq
    %v1591 = vshrl.u32 %v1590, 7
    %v1592 = vsub.s32 0, %v1591
    %v1593 = vrot.slane %v1588, %v1592
    %v1611 = vunpack.c.l.b16 %v1572
    %v1612 = vunpack.c.l.b16 %v1573
    %v1613 = vunpack.c.l.b16 %v1574
    %v1614 = vunpack.c.l.b16 %v1575
    %v1615 = vunpack.c.l.b16 %v1576
    %v1616 = vunpack.c.l.b16 %v1577
    %v1617 = vunpack.c.l.b16 %v1578
    %v1618 = vunpack.c.l.b16 %v1579
    %v1619 = vunpack.c.l.b16 %v1580
    %v1620 = vunpack.c.l.b16 %v1581
    %v1621 = vunpack.c.l.b16 %v1582
    %v1622 = vunpack.c.l.b16 %v1583
    %v1623 = vunpack.c.l.b16 %v1584
    %v1624 = vunpack.c.l.b16 %v1585
    %v1625 = vunpack.c.l.b16 %v1586
    %v1626 = vunpack.c.l.b16 %v1587
    %v1627 = vpack.c.b16 %v1612, %v1611
    %v1628 = vpack.c.b16 %v1614, %v1613
    %v1629 = vpack.c.b16 %v1616, %v1615
    %v1630 = vpack.c.b16 %v1618, %v1617
    %v1631 = vpack.c.b16 %v1620, %v1619
    %v1632 = vpack.c.b16 %v1622, %v1621
    %v1633 = vpack.c.b16 %v1624, %v1623
    %v1634 = vpack.c.b16 %v1626, %v1625
    %1643 = vmatprep.subr.bf16.mxu0 0
    %1644 = vmatpush1.bf16.msra.mxu0 %v1634
    %1645 = vmatprep.subr.bf16.mxu0 0
    %1646 = vmatpush1.bf16.msra.mxu0 %v1633
    %1647 = vmatprep.subr.bf16.mxu0 0
    %1648 = vmatpush1.bf16.msra.mxu0 %v1632
    %1649 = vmatprep.subr.bf16.mxu0 0
    %1650 = vmatpush1.bf16.msra.mxu0 %v1631
    %1651 = vmatprep.subr.bf16.mxu0 0
    %1652 = vmatpush1.bf16.msra.mxu0 %v1630
    %1653 = vmatprep.subr.bf16.mxu0 0
    %1654 = vmatpush1.bf16.msra.mxu0 %v1629
    %1655 = vmatprep.subr.bf16.mxu0 0
    %1656 = vmatpush1.bf16.msra.mxu0 %v1628
    %1657 = vmatprep.subr.bf16.mxu0 0
    %1658 = vmatpush1.bf16.msra.mxu0 %v1627
    %1659 = vmatprep.subr.bf16.mxu0 0
    %1660 = vmatpush2.bf16.msra.mxu0 0
    %1661 = vmatprep.subr.bf16.mxu0 0
    %1662 = vmatpush2.bf16.msra.mxu0 0
    %1663 = vmatprep.subr.bf16.mxu0 0
    %1664 = vmatpush2.bf16.msra.mxu0 0
    %1665 = vmatprep.subr.bf16.mxu0 0
    %1666 = vmatpush2.bf16.msra.mxu0 0
    %1667 = vmatprep.subr.bf16.mxu0 0
    %1668 = vmatpush2.bf16.msra.mxu0 0
    %1669 = vmatprep.subr.bf16.mxu0 0
    %1670 = vmatpush2.bf16.msra.mxu0 0
    %1671 = vmatprep.subr.bf16.mxu0 0
    %1672 = vmatpush2.bf16.msra.mxu0 0
    %1673 = vmatprep.subr.bf16.mxu0 0
    %1674 = vmatpush2.bf16.msra.mxu0 0
    %1675 = vmatprep.mubr.bf16.mxu0 0
    %1676 = vmatmul.mubr.bf16.gmra.mxu0 %v1570
    %v1677 = vpop.f32.mrf.mxu0
    %v1678 = vadd.f32 %v1593, %v1677
    %v1679 = vpop.f32.mrf.mxu0
    %v1680 = vpop.f32.mrf.mxu0
    %v1681 = vadd.f32 %v1593, %v1680
    %v1682 = vpop.f32.mrf.mxu0
    %1683 = vmatprep.mubr.bf16.mxu0 0
    %1684 = vmatmul.mubr.bf16.gmra.mxu0 %v1571
    %v1685 = vpop.f32.mrf.mxu0
    %v1686 = vadd.f32 %v1593, %v1685
    %v1687 = vpop.f32.mrf.mxu0
    %v1688 = vpop.f32.mrf.mxu0
    %v1689 = vadd.f32 %v1593, %v1688
    %v1690 = vpop.f32.mrf.mxu0
    %1691 = vdwg.mxu0
    %1692 = vst [vmem:[#allocation12] sm:$0xff] %v1678
    %1693 = vst [vmem:[#allocation12 + $0x8] sm:$0xff] %v1681
    %1694 = vst [vmem:[#allocation12 + $0x10] sm:$0xff] %v1686
    %1695 = vst [vmem:[#allocation12 + $0x18] sm:$0xff] %v1689
    // Predicated region
    $region58: #{tpu_custom_call.1} parent=1 // pred_check
      _
    $region59: #{tpu_custom_call.1} parent=1 // pred_check_branch
      %1697 = sbr.rel (0) target = $region61
    $region60: #{tpu_custom_call.1} parent=1 // pred_region
      %s1699 = ssub.s32 512, 512
      %1700 = vsyncadd [#allocation5], %s1699
      %s1701 = sshll.u32 [#allocation12], 4
      %s1702 = int_to_ptr.vmem [resolvable:$true] %s1701
      %1707 = dma.vmem_to_hbm [thread:$0]  %s1702, 512, %s9, [#allocation5], 128, 128, 8
    $region61: #{tpu_custom_call.1} parent=1 // pred_fallthru
      _
    // Predicated region
    $region62: #{tpu_custom_call.1} parent=1 // pred_check
      _
    $region63: #{tpu_custom_call.1} parent=1 // pred_check_branch
      %1709 = sbr.rel (0) target = $region65
    $region64: #{tpu_custom_call.1} parent=1 // pred_region
      %1710 = dma.done [#allocation5], 512
    $region65: #{tpu_custom_call.1} parent=1 // pred_fallthru
      _
    %1711 = vsyncpa [#allocation4], 1
    %1712 = vsyncpa [#allocation7], 1
    %1713 = vsyncpa [#allocation10], 1
    %1714 = vsyncpa [#allocation5], 1

</llo_original>
